<compile_context>
chip_gen: v6e
topology: v6e:2x2x1
jax: 0.10.0
libtpu: 0.0.40
codegen_flags: <defaults>
</compile_context>

<pallas_src>
import math
import functools

import jax
import jax.numpy as jnp
from jax import lax
from jax.experimental import pallas as pl
from jax.experimental.pallas import tpu as pltpu


def attention_block_kernel(x_ref, wqkv_ref, bqkv_ref, wproj_ref, bproj_ref,
                           out_ref, qkv_s, a_s,
                           *, num_heads, num_groups, eps, t_true, kv_blk):
    xb = x_ref[0]                                   # [C, Tp] f32
    C, Tp = xb.shape
    ch = C // num_heads
    cg = C // num_groups
    count = float(cg * t_true)

    # ---------------- GroupNorm stats (f32, one-pass, clamped var) ----------
    s_c = jnp.sum(xb, axis=1, keepdims=True)        # [C, 1]  (zero-padding is inert)
    ss_c = jnp.sum(xb * xb, axis=1, keepdims=True)  # [C, 1]
    # one-hot group membership built in-kernel (no HBM input, no int division)
    ci = lax.broadcasted_iota(jnp.int32, (C, num_groups), 0)
    gi = lax.broadcasted_iota(jnp.int32, (C, num_groups), 1) * cg
    one_hot = ((ci >= gi) & (ci < gi + cg)).astype(jnp.float32)      # [C, G]
    s_g = lax.dot_general(one_hot, s_c, (((0,), (0,)), ((), ())),
                          preferred_element_type=jnp.float32)        # [G, 1]
    ss_g = lax.dot_general(one_hot, ss_c, (((0,), (0,)), ((), ())),
                           preferred_element_type=jnp.float32)       # [G, 1]
    mean_g = s_g * (1.0 / count)
    var_g = jnp.maximum(ss_g * (1.0 / count) - mean_g * mean_g, 0.0)
    inv_g = lax.rsqrt(var_g + eps)
    mean_c = jnp.dot(one_hot, mean_g, preferred_element_type=jnp.float32)  # [C, 1]
    inv_c = jnp.dot(one_hot, inv_g, preferred_element_type=jnp.float32)    # [C, 1]
    # gamma/beta are folded into wqkv/bqkv host-side -> plain normalization here
    xn = ((xb - mean_c) * inv_c).astype(jnp.bfloat16)                # [C, Tp] bf16

    # ---------------- fused qkv 1x1 conv (bf16 MXU, f32 accum) --------------
    qkv = jnp.dot(wqkv_ref[...], xn,
                  preferred_element_type=jnp.float32) + bqkv_ref[...]   # [3C, Tp] f32
    qkv_s[...] = qkv.astype(jnp.bfloat16)           # head-sliceable scratch

    num_kv = Tp // kv_blk
    stride = 3 * ch

    # ---------------- per-head flash-style attention ------------------------
    def head_body(h, carry):
        base = h * stride
        if stride % 8 == 0:
            base = pl.multiple_of(base, 8)
        q = qkv_s[pl.ds(base, ch), :]               # [ch, Tp] bf16 (scale folded in)

        m0 = jnp.full((1, Tp), -1e30, dtype=jnp.float32)
        l0 = jnp.zeros((1, Tp), dtype=jnp.float32)
        a0 = jnp.zeros((ch, Tp), dtype=jnp.float32)

        def kv_body(j, st):
            m, l, acc = st
            start = pl.multiple_of(j * kv_blk, kv_blk)
            kj = qkv_s[pl.ds(base + ch, ch), pl.ds(start, kv_blk)]       # [ch, kv] bf16
            vj = qkv_s[pl.ds(base + 2 * ch, ch), pl.ds(start, kv_blk)]   # [ch, kv] bf16
            # s[s_idx, t] = sum_c k[c, s_idx] * q[c, t]  -> keep stats lane-major
            s = lax.dot_general(kj, q, (((0,), (0,)), ((), ())),
                                preferred_element_type=jnp.float32)      # [kv, Tp] f32
            if t_true != Tp:  # static: mask padded key positions
                key_pos = start + lax.broadcasted_iota(jnp.int32, s.shape, 0)
                s = jnp.where(key_pos < t_true, s, -1e30)
            m_new = jnp.maximum(m, jnp.max(s, axis=0, keepdims=True))    # [1, Tp]
            alpha = jnp.exp(m - m_new)                                   # [1, Tp]
            p = jnp.exp(s - m_new)                                       # [kv, Tp] f32
            l_new = alpha * l + jnp.sum(p, axis=0, keepdims=True)
            acc_new = alpha * acc + jnp.dot(vj, p.astype(jnp.bfloat16),
                                            preferred_element_type=jnp.float32)
            return m_new, l_new, acc_new

        m, l, acc = lax.fori_loop(0, num_kv, kv_body, (m0, l0, a0))
        a_h = (acc * pl.reciprocal(l, approx=True)).astype(jnp.bfloat16)  # [ch, Tp]

        arow = h * ch
        if ch % 8 == 0:
            arow = pl.multiple_of(arow, 8)
        a_s[pl.ds(arow, ch), :] = a_h               # head output in channel order
        return carry

    lax.fori_loop(0, num_heads, head_body, 0)

    # ---------------- fused proj_out + residual epilogue (single matmul) ----
    out_ref[0] = x_ref[0] + bproj_ref[...] + jnp.dot(
        wproj_ref[...], a_s[...], preferred_element_type=jnp.float32)   # [C, Tp] f32


def attention_block(x, gamma, beta, wqkv, bqkv, wproj, bproj,
                    *, num_heads, num_groups=32, eps=1e-5, kv_block=256):
    B, C, H, W = x.shape
    assert C % num_heads == 0 and C % num_groups == 0
    T = H * W
    ch = C // num_heads

    # lane-dense seq length (pad to multiple of 128; padded keys masked in-kernel)
    t_pad = max(128, ((T + 127) // 128) * 128)
    x3 = x.reshape(B, C, T).astype(jnp.float32)
    if t_pad != T:
        x3 = jnp.pad(x3, ((0, 0), (0, 0), (0, t_pad - T)))

    kv_blk = max(128, min(int(kv_block), t_pad))
    if t_pad % kv_blk != 0:
        kv_blk = 128

    # ---- fold GroupNorm affine + legacy q/k scale into the qkv conv (host) ----
    gamma_v = gamma.reshape(C).astype(jnp.float32)
    beta_v = beta.reshape(C).astype(jnp.float32)
    wqkv_f = wqkv.reshape(3 * C, C).astype(jnp.float32)
    bqkv_f = bqkv.reshape(3 * C).astype(jnp.float32)
    scale = float(ch) ** (-0.25)
    row_scale = jnp.tile(
        jnp.concatenate([jnp.full((2 * ch,), scale, jnp.float32),
                         jnp.ones((ch,), jnp.float32)]), num_heads)      # [3C]
    w_eff = (wqkv_f * gamma_v[None, :]) * row_scale[:, None]
    b_eff = (wqkv_f @ beta_v + bqkv_f) * row_scale
    w_eff = w_eff.astype(jnp.bfloat16)                                   # [3C, C]
    b_eff = b_eff.reshape(3 * C, 1).astype(jnp.float32)                  # [3C, 1]
    wproj_b = wproj.reshape(C, C).astype(jnp.bfloat16)                   # [C, C]
    bproj_c = bproj.reshape(C, 1).astype(jnp.float32)                    # [C, 1]

    kernel = functools.partial(attention_block_kernel,
                               num_heads=num_heads, num_groups=num_groups,
                               eps=float(eps), t_true=T, kv_blk=kv_blk)
    const = lambda b: (0, 0)
    out = pl.pallas_call(
        kernel,
        out_shape=jax.ShapeDtypeStruct((B, C, t_pad), jnp.float32),
        grid=(B,),
        in_specs=[
            pl.BlockSpec((1, C, t_pad), lambda b: (b, 0, 0)),   # x
            pl.BlockSpec((3 * C, C), const),                    # W_qkv (scale/affine folded, bf16)
            pl.BlockSpec((3 * C, 1), const),                    # b_qkv (folded, f32)
            pl.BlockSpec((C, C), const),                        # W_proj (bf16)
            pl.BlockSpec((C, 1), const),                        # b_proj (f32)
        ],
        out_specs=pl.BlockSpec((1, C, t_pad), lambda b: (b, 0, 0)),
        scratch_shapes=[pltpu.VMEM((3 * C, t_pad), jnp.bfloat16),   # qkv buffer
                        pltpu.VMEM((C, t_pad), jnp.bfloat16)],      # attention output
        compiler_params=pltpu.CompilerParams(
            dimension_semantics=("parallel",),           # batch -> v7x megacore
            vmem_limit_bytes=64 * 1024 * 1024),
    )(x3, w_eff, b_eff, wproj_b, bproj_c)

    if t_pad != T:
        out = out[:, :, :T]
    return out.reshape(B, C, H, W)


def attention_block_reference(x, gamma, beta, wqkv, bqkv, wproj, bproj,
                              *, num_heads, num_groups=32, eps=1e-5):
    """Pure-JAX f32 reference mirroring the PyTorch module."""
    B, C, H, W = x.shape
    T = H * W
    xr = x.reshape(B, C, T)
    xg = xr.reshape(B, num_groups, (C // num_groups) * T)
    mean = xg.mean(-1, keepdims=True)
    var = xg.var(-1, keepdims=True)                 # biased, like torch GroupNorm
    xn = ((xg - mean) / jnp.sqrt(var + eps)).reshape(B, C, T)
    xn = xn * gamma.reshape(1, C, 1) + beta.reshape(1, C, 1)
    qkv = jnp.einsum('oc,bct->bot', wqkv, xn) + bqkv.reshape(1, -1, 1)
    ch = C // num_heads
    qkv_h = qkv.reshape(B * num_heads, 3 * ch, T)
    q, k, v = qkv_h[:, :ch], qkv_h[:, ch:2 * ch], qkv_h[:, 2 * ch:]
    scale = 1.0 / math.sqrt(math.sqrt(ch))
    w = jnp.einsum('bct,bcs->bts', q * scale, k * scale)
    w = jax.nn.softmax(w, axis=-1)
    a = jnp.einsum('bts,bcs->bct', w, v).reshape(B, C, T)
    hp = jnp.einsum('oc,bct->bot', wproj, a) + bproj.reshape(1, C, 1)
    return (xr + hp).reshape(B, C, H, W)


if __name__ == "__main__":
    B, C, H, W = 2, 64, 16, 16          # T = 256 (lane-dense, single 256 KV block)
    NUM_HEADS = 4                       # channels % num_heads == 0
    NUM_GROUPS = 32                     # normalization(channels) == GroupNorm(32, C)

    key = jax.random.PRNGKey(0)
    kx, kg, kb, kw1, kb1, kw2, kb2 = jax.random.split(key, 7)

    x = jax.random.normal(kx, (B, C, H, W), dtype=jnp.float32)
    gamma = (1.0 + 0.1 * jax.random.normal(kg, (C,))).astype(jnp.float32)
    beta = (0.1 * jax.random.normal(kb, (C,))).astype(jnp.float32)
    wqkv = (jax.random.normal(kw1, (3 * C, C)) / math.sqrt(C)).astype(jnp.float32)
    bqkv = (0.1 * jax.random.normal(kb1, (3 * C,))).astype(jnp.float32)
    # NOTE: the original module zero-initializes proj_out (zero_module), making
    # the block an identity at init; we use nonzero deterministic weights here
    # so the full kernel path is exercised.
    wproj = (jax.random.normal(kw2, (C, C)) / math.sqrt(C)).astype(jnp.float32)
    bproj = (0.1 * jax.random.normal(kb2, (C,))).astype(jnp.float32)

    out = attention_block(x, gamma, beta, wqkv, bqkv, wproj, bproj,
                          num_heads=NUM_HEADS, num_groups=NUM_GROUPS)
    out = jax.block_until_ready(out)

    ref = attention_block_reference(x, gamma, beta, wqkv, bqkv, wproj, bproj,
                                    num_heads=NUM_HEADS, num_groups=NUM_GROUPS)
    ref = jax.block_until_ready(ref)

    assert out.shape == (B, C, H, W)
    # kernel uses bf16 MXU inputs with f32 accumulation -> compare with a
    # bf16-appropriate tolerance against the f32 reference.
    max_err = float(jnp.max(jnp.abs(out - ref)))
    assert jnp.allclose(out, ref, rtol=5e-2, atol=5e-2), max_err
    print("KERNEL_OK")
</pallas_src>

<mosaic_0001>
module attributes {stable_mosaic.version = 11 : i64} {
  func.func @attention_block_kernel(%arg0: i32, %arg1: memref<1x64x256xf32, #tpu.memory_space<vmem>>, %arg2: memref<192x64xbf16, #tpu.memory_space<vmem>>, %arg3: memref<192x1xf32, #tpu.memory_space<vmem>>, %arg4: memref<64x64xbf16, #tpu.memory_space<vmem>>, %arg5: memref<64x1xf32, #tpu.memory_space<vmem>>, %arg6: memref<1x64x256xf32, #tpu.memory_space<vmem>>, %arg7: memref<192x256xbf16, #tpu.memory_space<vmem>>, %arg8: memref<64x256xbf16, #tpu.memory_space<vmem>>) attributes {dimension_semantics = [#tpu.dimension_semantics<parallel>], iteration_bounds = array<i64: 2>, scalar_prefetch = 0 : i64, scratch_operands = 2 : i64, tpu.core_type = #tpu.core_type<tc>, window_params = [{transform_indices = @transform_0, window_bounds = array<i64: 1, 64, 256>}, {pipeline_mode = #tpu.pipeline_mode<synchronous>, transform_indices = @transform_1, window_bounds = array<i64: 192, 64>}, {pipeline_mode = #tpu.pipeline_mode<synchronous>, transform_indices = @transform_2, window_bounds = array<i64: 192, 1>}, {pipeline_mode = #tpu.pipeline_mode<synchronous>, transform_indices = @transform_3, window_bounds = array<i64: 64, 64>}, {pipeline_mode = #tpu.pipeline_mode<synchronous>, transform_indices = @transform_4, window_bounds = array<i64: 64, 1>}, {transform_indices = @transform_5, window_bounds = array<i64: 1, 64, 256>}]} {
    %c0 = arith.constant 0 : index
    %c0_0 = arith.constant 0 : index
    %c0_1 = arith.constant 0 : index
    %0 = vector.load %arg1[%c0, %c0_0, %c0_1] : memref<1x64x256xf32, #tpu.memory_space<vmem>>, vector<1x64x256xf32>
    %1 = vector.shape_cast %0 : vector<1x64x256xf32> to vector<64x256xf32>
    %cst = arith.constant dense<0.000000e+00> : vector<64xf32>
    %2 = vector.multi_reduction <add>, %1, %cst [1] : vector<64x256xf32> to vector<64xf32>
    %3 = vector.shape_cast %2 : vector<64xf32> to vector<64x1xf32>
    %4 = arith.mulf %1, %1 : vector<64x256xf32>
    %cst_2 = arith.constant dense<0.000000e+00> : vector<64xf32>
    %5 = vector.multi_reduction <add>, %4, %cst_2 [1] : vector<64x256xf32> to vector<64xf32>
    %6 = vector.shape_cast %5 : vector<64xf32> to vector<64x1xf32>
    %7 = tpu.iota {dimensions = array<i32: 0>} : vector<64x32xi32>
    %8 = tpu.iota {dimensions = array<i32: 1>} : vector<64x32xi32>
    %c2_i32 = arith.constant 2 : i32
    %9 = vector.broadcast %c2_i32 : i32 to vector<64x32xi32>
    %10 = arith.muli %8, %9 : vector<64x32xi32>
    %11 = arith.cmpi sge, %7, %10 : vector<64x32xi32>
    %c2_i32_3 = arith.constant 2 : i32
    %12 = vector.broadcast %c2_i32_3 : i32 to vector<64x32xi32>
    %13 = arith.addi %10, %12 : vector<64x32xi32>
    %14 = arith.cmpi slt, %7, %13 : vector<64x32xi32>
    %15 = arith.andi %11, %14 : vector<64x32xi1>
    %16 = arith.extui %15 : vector<64x32xi1> to vector<64x32xi32>
    %17 = arith.sitofp %16 : vector<64x32xi32> to vector<64x32xf32>
    %cst_4 = arith.constant dense<0.000000e+00> : vector<32x1xf32>
    %18 = tpu.matmul %17, %3, %cst_4 {dimension_numbers = #tpu.dot_dimension_numbers<[0], [0], [1], [1], [0, 1, 1, 1], [], []>} : vector<64x32xf32>, vector<64x1xf32>, vector<32x1xf32> -> vector<32x1xf32>
    %cst_5 = arith.constant dense<0.000000e+00> : vector<32x1xf32>
    %19 = tpu.matmul %17, %6, %cst_5 {dimension_numbers = #tpu.dot_dimension_numbers<[0], [0], [1], [1], [0, 1, 1, 1], [], []>} : vector<64x32xf32>, vector<64x1xf32>, vector<32x1xf32> -> vector<32x1xf32>
    %cst_6 = arith.constant 0.001953125 : f32
    %20 = vector.broadcast %cst_6 : f32 to vector<32x1xf32>
    %21 = arith.mulf %18, %20 : vector<32x1xf32>
    %cst_7 = arith.constant 0.001953125 : f32
    %22 = vector.broadcast %cst_7 : f32 to vector<32x1xf32>
    %23 = arith.mulf %19, %22 : vector<32x1xf32>
    %24 = arith.mulf %21, %21 : vector<32x1xf32>
    %25 = arith.subf %23, %24 : vector<32x1xf32>
    %cst_8 = arith.constant 0.000000e+00 : f32
    %26 = vector.broadcast %cst_8 : f32 to vector<32x1xf32>
    %27 = arith.maximumf %25, %26 : vector<32x1xf32>
    %cst_9 = arith.constant 9.99999974E-6 : f32
    %28 = vector.broadcast %cst_9 : f32 to vector<32x1xf32>
    %29 = arith.addf %27, %28 : vector<32x1xf32>
    %30 = math.rsqrt %29 : vector<32x1xf32>
    %cst_10 = arith.constant dense<0.000000e+00> : vector<64x1xf32>
    %31 = tpu.matmul %17, %21, %cst_10 {dimension_numbers = #tpu.dot_dimension_numbers<[1], [0], [0], [1], [0, 0, 1, 1], [], []>} : vector<64x32xf32>, vector<32x1xf32>, vector<64x1xf32> -> vector<64x1xf32>
    %cst_11 = arith.constant dense<0.000000e+00> : vector<64x1xf32>
    %32 = tpu.matmul %17, %30, %cst_11 {dimension_numbers = #tpu.dot_dimension_numbers<[1], [0], [0], [1], [0, 0, 1, 1], [], []>} : vector<64x32xf32>, vector<32x1xf32>, vector<64x1xf32> -> vector<64x1xf32>
    %33 = vector.broadcast %31 : vector<64x1xf32> to vector<64x256xf32>
    %34 = arith.subf %1, %33 : vector<64x256xf32>
    %35 = vector.broadcast %32 : vector<64x1xf32> to vector<64x256xf32>
    %36 = arith.mulf %34, %35 : vector<64x256xf32>
    %37 = arith.truncf %36 : vector<64x256xf32> to vector<64x256xbf16>
    %c0_12 = arith.constant 0 : index
    %c0_13 = arith.constant 0 : index
    %38 = vector.load %arg2[%c0_12, %c0_13] : memref<192x64xbf16, #tpu.memory_space<vmem>>, vector<192x64xbf16>
    %cst_14 = arith.constant dense<0.000000e+00> : vector<192x256xf32>
    %39 = tpu.matmul %38, %37, %cst_14 {dimension_numbers = #tpu.dot_dimension_numbers<[1], [0], [0], [1], [0, 0, 1, 1], [], []>} : vector<192x64xbf16>, vector<64x256xbf16>, vector<192x256xf32> -> vector<192x256xf32>
    %c0_15 = arith.constant 0 : index
    %c0_16 = arith.constant 0 : index
    %40 = vector.load %arg3[%c0_15, %c0_16] : memref<192x1xf32, #tpu.memory_space<vmem>>, vector<192x1xf32>
    %41 = vector.broadcast %40 : vector<192x1xf32> to vector<192x256xf32>
    %42 = arith.addf %39, %41 : vector<192x256xf32>
    %43 = arith.truncf %42 : vector<192x256xf32> to vector<192x256xbf16>
    %c0_17 = arith.constant 0 : index
    %c0_18 = arith.constant 0 : index
    %44 = vector.load %arg7[%c0_17, %c0_18] : memref<192x256xbf16, #tpu.memory_space<vmem>>, vector<192x256xbf16>
    tpu.vector_store %arg7[%c0_17, %c0_18], %43 {strides = array<i32>} : memref<192x256xbf16, #tpu.memory_space<vmem>>, vector<192x256xbf16>,
    %c0_i32 = arith.constant 0 : i32
    %c4_i32 = arith.constant 4 : i32
    %45 = arith.addi %c0_i32, %c4_i32 : i32
    %c1_i32 = arith.constant 1 : i32
    scf.for %arg9 = %c0_i32 to %45 step %c1_i32  : i32 {
      %c48_i32 = arith.constant 48 : i32
      %58 = arith.muli %arg9, %c48_i32 : i32
      %59 = tpu.assume_multiple %58, 8 : i32
      %60 = arith.index_cast %59 : i32 to index
      %c0_33 = arith.constant 0 : index
      %61 = vector.load %arg7[%60, %c0_33] : memref<192x256xbf16, #tpu.memory_space<vmem>>, vector<16x256xbf16>
      %cst_34 = arith.constant -1.000000e+30 : f32
      %62 = vector.broadcast %cst_34 : f32 to vector<1x256xf32>
      %cst_35 = arith.constant 0.000000e+00 : f32
      %63 = vector.broadcast %cst_35 : f32 to vector<1x256xf32>
      %cst_36 = arith.constant 0.000000e+00 : f32
      %64 = vector.broadcast %cst_36 : f32 to vector<16x256xf32>
      %c0_i32_37 = arith.constant 0 : i32
      %c256_i32 = arith.constant 256 : i32
      %65 = arith.muli %c0_i32_37, %c256_i32 : i32
      %66 = tpu.assume_multiple %65, 256 : i32
      %c16_i32 = arith.constant 16 : i32
      %67 = arith.addi %59, %c16_i32 : i32
      %68 = arith.index_cast %67 : i32 to index
      %69 = arith.index_cast %66 : i32 to index
      %70 = vector.load %arg7[%68, %69] : memref<192x256xbf16, #tpu.memory_space<vmem>>, vector<16x256xbf16>
      %c32_i32 = arith.constant 32 : i32
      %71 = arith.addi %59, %c32_i32 : i32
      %72 = arith.index_cast %71 : i32 to index
      %73 = arith.index_cast %66 : i32 to index
      %74 = vector.load %arg7[%72, %73] : memref<192x256xbf16, #tpu.memory_space<vmem>>, vector<16x256xbf16>
      %cst_38 = arith.constant dense<0.000000e+00> : vector<256x256xf32>
      %75 = tpu.matmul %70, %61, %cst_38 {dimension_numbers = #tpu.dot_dimension_numbers<[0], [0], [1], [1], [0, 1, 1, 1], [], []>} : vector<16x256xbf16>, vector<16x256xbf16>, vector<256x256xf32> -> vector<256x256xf32>
      %cst_39 = arith.constant dense<0xFF800000> : vector<256xf32>
      %76 = vector.multi_reduction <maximumf>, %75, %cst_39 [0] : vector<256x256xf32> to vector<256xf32>
      %77 = vector.shape_cast %76 : vector<256xf32> to vector<1x256xf32>
      %78 = arith.maximumf %62, %77 : vector<1x256xf32>
      %79 = arith.subf %62, %78 : vector<1x256xf32>
      %80 = math.exp %79 : vector<1x256xf32>
      %81 = vector.broadcast %78 : vector<1x256xf32> to vector<256x256xf32>
      %82 = arith.subf %75, %81 : vector<256x256xf32>
      %83 = math.exp %82 : vector<256x256xf32>
      %84 = arith.mulf %80, %63 : vector<1x256xf32>
      %cst_40 = arith.constant dense<0.000000e+00> : vector<256xf32>
      %85 = vector.multi_reduction <add>, %83, %cst_40 [0] : vector<256x256xf32> to vector<256xf32>
      %86 = vector.shape_cast %85 : vector<256xf32> to vector<1x256xf32>
      %87 = arith.addf %84, %86 : vector<1x256xf32>
      %88 = vector.broadcast %80 : vector<1x256xf32> to vector<16x256xf32>
      %89 = arith.mulf %88, %64 : vector<16x256xf32>
      %90 = arith.truncf %83 : vector<256x256xf32> to vector<256x256xbf16>
      %cst_41 = arith.constant dense<0.000000e+00> : vector<16x256xf32>
      %91 = tpu.matmul %74, %90, %cst_41 {dimension_numbers = #tpu.dot_dimension_numbers<[1], [0], [0], [1], [0, 0, 1, 1], [], []>} : vector<16x256xbf16>, vector<256x256xbf16>, vector<16x256xf32> -> vector<16x256xf32>
      %92 = arith.addf %89, %91 : vector<16x256xf32>
      %c1_i32_42 = arith.constant 1 : i32
      %93 = tpu.reciprocal %87 {approx = true} : vector<1x256xf32> -> vector<1x256xf32>
      %94 = vector.broadcast %93 : vector<1x256xf32> to vector<16x256xf32>
      %95 = arith.mulf %92, %94 : vector<16x256xf32>
      %96 = arith.truncf %95 : vector<16x256xf32> to vector<16x256xbf16>
      %c16_i32_43 = arith.constant 16 : i32
      %97 = arith.muli %arg9, %c16_i32_43 : i32
      %98 = tpu.assume_multiple %97, 8 : i32
      %99 = arith.index_cast %98 : i32 to index
      %c0_44 = arith.constant 0 : index
      %100 = vector.load %arg8[%99, %c0_44] : memref<64x256xbf16, #tpu.memory_space<vmem>>, vector<16x256xbf16>
      tpu.vector_store %arg8[%99, %c0_44], %96 {strides = array<i32>} : memref<64x256xbf16, #tpu.memory_space<vmem>>, vector<16x256xbf16>,
    }
    %c4_i32_19 = arith.constant 4 : i32
    %c0_20 = arith.constant 0 : index
    %c0_21 = arith.constant 0 : index
    %c0_22 = arith.constant 0 : index
    %46 = vector.load %arg1[%c0_20, %c0_21, %c0_22] : memref<1x64x256xf32, #tpu.memory_space<vmem>>, vector<1x64x256xf32>
    %47 = vector.shape_cast %46 : vector<1x64x256xf32> to vector<64x256xf32>
    %c0_23 = arith.constant 0 : index
    %c0_24 = arith.constant 0 : index
    %48 = vector.load %arg5[%c0_23, %c0_24] : memref<64x1xf32, #tpu.memory_space<vmem>>, vector<64x1xf32>
    %49 = vector.broadcast %48 : vector<64x1xf32> to vector<64x256xf32>
    %50 = arith.addf %47, %49 : vector<64x256xf32>
    %c0_25 = arith.constant 0 : index
    %c0_26 = arith.constant 0 : index
    %51 = vector.load %arg4[%c0_25, %c0_26] : memref<64x64xbf16, #tpu.memory_space<vmem>>, vector<64x64xbf16>
    %c0_27 = arith.constant 0 : index
    %c0_28 = arith.constant 0 : index
    %52 = vector.load %arg8[%c0_27, %c0_28] : memref<64x256xbf16, #tpu.memory_space<vmem>>, vector<64x256xbf16>
    %cst_29 = arith.constant dense<0.000000e+00> : vector<64x256xf32>
    %53 = tpu.matmul %51, %52, %cst_29 {dimension_numbers = #tpu.dot_dimension_numbers<[1], [0], [0], [1], [0, 0, 1, 1], [], []>} : vector<64x64xbf16>, vector<64x256xbf16>, vector<64x256xf32> -> vector<64x256xf32>
    %54 = arith.addf %50, %53 : vector<64x256xf32>
    %c0_30 = arith.constant 0 : index
    %c0_31 = arith.constant 0 : index
    %c0_32 = arith.constant 0 : index
    %55 = vector.load %arg6[%c0_30, %c0_31, %c0_32] : memref<1x64x256xf32, #tpu.memory_space<vmem>>, vector<1x64x256xf32>
    %56 = vector.shape_cast %55 : vector<1x64x256xf32> to vector<64x256xf32>
    %57 = vector.shape_cast %54 : vector<64x256xf32> to vector<1x64x256xf32>
    tpu.vector_store %arg6[%c0_30, %c0_31, %c0_32], %57 {strides = array<i32>} : memref<1x64x256xf32, #tpu.memory_space<vmem>>, vector<1x64x256xf32>,
    return
  }
  func.func @transform_0(%arg0: i32) -> (i32, i32, i32) {
    %c0_i32 = arith.constant 0 : i32
    %c0_i32_0 = arith.constant 0 : i32
    %c0_i32_1 = arith.constant 0 : i32
    return %arg0, %c0_i32, %c0_i32_0 : i32, i32, i32
  }
  func.func @transform_1(%arg0: i32) -> (i32, i32) {
    %c0_i32 = arith.constant 0 : i32
    %c0_i32_0 = arith.constant 0 : i32
    %c0_i32_1 = arith.constant 0 : i32
    return %c0_i32, %c0_i32_0 : i32, i32
  }
  func.func @transform_2(%arg0: i32) -> (i32, i32) {
    %c0_i32 = arith.constant 0 : i32
    %c0_i32_0 = arith.constant 0 : i32
    %c0_i32_1 = arith.constant 0 : i32
    return %c0_i32, %c0_i32_0 : i32, i32
  }
  func.func @transform_3(%arg0: i32) -> (i32, i32) {
    %c0_i32 = arith.constant 0 : i32
    %c0_i32_0 = arith.constant 0 : i32
    %c0_i32_1 = arith.constant 0 : i32
    return %c0_i32, %c0_i32_0 : i32, i32
  }
  func.func @transform_4(%arg0: i32) -> (i32, i32) {
    %c0_i32 = arith.constant 0 : i32
    %c0_i32_0 = arith.constant 0 : i32
    %c0_i32_1 = arith.constant 0 : i32
    return %c0_i32, %c0_i32_0 : i32, i32
  }
  func.func @transform_5(%arg0: i32) -> (i32, i32, i32) {
    %c0_i32 = arith.constant 0 : i32
    %c0_i32_0 = arith.constant 0 : i32
    %c0_i32_1 = arith.constant 0 : i32
    return %arg0, %c0_i32, %c0_i32_0 : i32, i32, i32
  }
}

</mosaic_0001>

<llo_original>
// kernel: tpu_custom_call.1
$region0: #{tpu_custom_call.1}
  #allocation0 [shape = 'u32[]', space=smem, size = 0x4, offset = 0x4, fixed_abs, tag = 'smem constant byte address 0x4 - core index']
  #allocation1 [shape = 'u32[144,128]{1,0:T(1,128)}', space=vmem, size = 0x12000, scoped, tag = 'internal scratch']
  #allocation2 [shape = 'bf16[192,256]{1,0:T(8,128)(2,1)}', space=vmem, size = 0x18000, scoped, tag = 'scratch operand']
  #allocation3 [shape = 'bf16[64,256]{1,0:T(8,128)(2,1)}', space=vmem, size = 0x8000, scoped, tag = 'scratch operand']
  %s0 = inlined_call_operand.vmem [shape: f32[2,64,256], index: 0, kind: input, shape index: {}]
  %s1 = inlined_call_operand.vmem [shape: bf16[192,64], index: 1, kind: input, shape index: {}]
  %s2 = inlined_call_operand.vmem [shape: f32[192,1], index: 2, kind: input, shape index: {}]
  %s3 = inlined_call_operand.vmem [shape: bf16[64,64], index: 3, kind: input, shape index: {}]
  %s4 = inlined_call_operand.vmem [shape: f32[64,1], index: 4, kind: input, shape index: {}]
  %s5 = inlined_call_operand.hbm [shape: f32[2,64,256], index: 5, kind: output, shape index: {}]
  %s6 = sld [smem:[#allocation0]]
  $region60: #{tpu_custom_call.1} parent=0
    _
  %s8 = ssub.s32 1, %s6
  %s9 = scalar_select 0, %s8, %s6
  $region1: #{tpu_custom_call.1} parent=0
    #allocation4 [shape = 'u8[131072]{0}', space=vmem, size = 0x20000, scoped, tag = 'output window, operand 0']
    #allocation5 [shape = 's32[2]{0}', space=sflag, size = 0x8, scoped, tag = 'scoped memory for tpu_custom_call.1']
    %10 = vsyncpa [#allocation5], 0
    %s11 = scalar_lea.sflag [#allocation5], 1
    %12 = vsyncpa %s11, 0
    loop: start=0, step=1, limit=4
    $region2: #{tpu_custom_call.1} parent=1 // loop_pre_header
      _
    $region3: #{tpu_custom_call.1} parent=1 // loop_header
      %s14 = sphi 0, %s18
      %p15 = scmp.ge.s32.totalorder %s14, 4
      %s24 = sphi 0, %s26
      %s27 = sphi 0, %s24
      %s28 = sphi 0, %s27
      %s44 = sphi 0, %s28
      %s48 = sphi 0, %s48
      %s50 = sphi 0, %s48
      %s51 = sphi 0, %s50
      %s65 = sphi 0, %s51
      %s69 = sphi 0, %s69
      %s71 = sphi 0, %s69
      %s72 = sphi 0, %s71
      %s86 = sphi 0, %s72
      %s90 = sphi 0, %s90
      %s92 = sphi 0, %s90
      %s93 = sphi 0, %s92
      %s107 = sphi 0, %s93
      %s111 = sphi 0, %s111
      %s113 = sphi 0, %s111
      %s114 = sphi 0, %s113
      %s128 = sphi 0, %s114
      %s134 = sphi 0, %s136
      %s137 = sphi 0, %s134
      %s138 = sphi 0, %s137
      %s154 = sphi 0, %s138
    $region4: #{tpu_custom_call.1} parent=1 // loop_header_branch
      %17 = sbr.rel (%p15) target = $region8
    $region5: #{tpu_custom_call.1} parent=1 // loop_body
      %s19 = ssub.s32 %s14, 1
      %s20 = ssub.s32 %s14, 2
      %s21 = sadd.s32 %s14, 1
      %s22 = ssub.s32 %s14, %s21
      %p23 = scmp.eq.s32.totalorder %s22, 0
      %s25 = sadd.s32 %s24, 1
      %s26 = scalar_select %p23, %s24, %s25
      %p29 = pneg %p23
      %p30 = scmp.eq.s32.totalorder %s14, 1
      %p31 = por %p29, %p30
      %p32 = scmp.ne.s32.totalorder %s24, %s27
      %p33 = scmp.eq.s32.totalorder %s14, 0
      %p34 = por %p32, %p33
      %p35 = scmp.ne.s32.totalorder %s24, %s27
      %p36 = scmp.eq.s32.totalorder %s19, 1
      %p37 = por %p35, %p36
      %p38 = scmp.ne.s32.totalorder %s27, %s28
      %p39 = scmp.eq.s32.totalorder %s19, 0
      %p40 = por %p38, %p39
      %p41 = scmp.ne.s32.totalorder %s27, %s28
      %p42 = scmp.eq.s32.totalorder %s20, 1
      %p43 = por %p41, %p42
      %p45 = scmp.ne.s32.totalorder %s28, %s44
      %p46 = scmp.eq.s32.totalorder %s20, 0
      %p47 = por %p45, %p46
      %s49 = sadd.s32 %s48, 1
      %p52 = scmp.eq.s32.totalorder %s14, 1
      %p53 = scmp.ne.s32.totalorder %s48, %s50
      %p54 = scmp.eq.s32.totalorder %s14, 0
      %p55 = por %p53, %p54
      %p56 = scmp.ne.s32.totalorder %s48, %s50
      %p57 = scmp.eq.s32.totalorder %s19, 1
      %p58 = por %p56, %p57
      %p59 = scmp.ne.s32.totalorder %s50, %s51
      %p60 = scmp.eq.s32.totalorder %s19, 0
      %p61 = por %p59, %p60
      %p62 = scmp.ne.s32.totalorder %s50, %s51
      %p63 = scmp.eq.s32.totalorder %s20, 1
      %p64 = por %p62, %p63
      %p66 = scmp.ne.s32.totalorder %s51, %s65
      %p67 = scmp.eq.s32.totalorder %s20, 0
      %p68 = por %p66, %p67
      %s70 = sadd.s32 %s69, 1
      %p73 = scmp.eq.s32.totalorder %s14, 1
      %p74 = scmp.ne.s32.totalorder %s69, %s71
      %p75 = scmp.eq.s32.totalorder %s14, 0
      %p76 = por %p74, %p75
      %p77 = scmp.ne.s32.totalorder %s69, %s71
      %p78 = scmp.eq.s32.totalorder %s19, 1
      %p79 = por %p77, %p78
      %p80 = scmp.ne.s32.totalorder %s71, %s72
      %p81 = scmp.eq.s32.totalorder %s19, 0
      %p82 = por %p80, %p81
      %p83 = scmp.ne.s32.totalorder %s71, %s72
      %p84 = scmp.eq.s32.totalorder %s20, 1
      %p85 = por %p83, %p84
      %p87 = scmp.ne.s32.totalorder %s72, %s86
      %p88 = scmp.eq.s32.totalorder %s20, 0
      %p89 = por %p87, %p88
      %s91 = sadd.s32 %s90, 1
      %p94 = scmp.eq.s32.totalorder %s14, 1
      %p95 = scmp.ne.s32.totalorder %s90, %s92
      %p96 = scmp.eq.s32.totalorder %s14, 0
      %p97 = por %p95, %p96
      %p98 = scmp.ne.s32.totalorder %s90, %s92
      %p99 = scmp.eq.s32.totalorder %s19, 1
      %p100 = por %p98, %p99
      %p101 = scmp.ne.s32.totalorder %s92, %s93
      %p102 = scmp.eq.s32.totalorder %s19, 0
      %p103 = por %p101, %p102
      %p104 = scmp.ne.s32.totalorder %s92, %s93
      %p105 = scmp.eq.s32.totalorder %s20, 1
      %p106 = por %p104, %p105
      %p108 = scmp.ne.s32.totalorder %s93, %s107
      %p109 = scmp.eq.s32.totalorder %s20, 0
      %p110 = por %p108, %p109
      %s112 = sadd.s32 %s111, 1
      %p115 = scmp.eq.s32.totalorder %s14, 1
      %p116 = scmp.ne.s32.totalorder %s111, %s113
      %p117 = scmp.eq.s32.totalorder %s14, 0
      %p118 = por %p116, %p117
      %p119 = scmp.ne.s32.totalorder %s111, %s113
      %p120 = scmp.eq.s32.totalorder %s19, 1
      %p121 = por %p119, %p120
      %p122 = scmp.ne.s32.totalorder %s113, %s114
      %p123 = scmp.eq.s32.totalorder %s19, 0
      %p124 = por %p122, %p123
      %p125 = scmp.ne.s32.totalorder %s113, %s114
      %p126 = scmp.eq.s32.totalorder %s20, 1
      %p127 = por %p125, %p126
      %p129 = scmp.ne.s32.totalorder %s114, %s128
      %p130 = scmp.eq.s32.totalorder %s20, 0
      %p131 = por %p129, %p130
      %s132 = ssub.s32 %s14, %s21
      %p133 = scmp.eq.s32.totalorder %s132, 0
      %s135 = sadd.s32 %s134, 1
      %s136 = scalar_select %p133, %s134, %s135
      %p139 = pneg %p133
      %p140 = scmp.eq.s32.totalorder %s14, 1
      %p141 = por %p139, %p140
      %p142 = scmp.ne.s32.totalorder %s134, %s137
      %p143 = scmp.eq.s32.totalorder %s14, 0
      %p144 = por %p142, %p143
      %p145 = scmp.ne.s32.totalorder %s134, %s137
      %p146 = scmp.eq.s32.totalorder %s19, 1
      %p147 = por %p145, %p146
      %p148 = scmp.ne.s32.totalorder %s137, %s138
      %p149 = scmp.eq.s32.totalorder %s19, 0
      %p150 = por %p148, %p149
      %p151 = scmp.ne.s32.totalorder %s137, %s138
      %p152 = scmp.eq.s32.totalorder %s20, 1
      %p153 = por %p151, %p152
      %p155 = scmp.ne.s32.totalorder %s138, %s154
      %p156 = scmp.eq.s32.totalorder %s20, 0
      %p157 = por %p155, %p156
      %p158 = scmp.le.s32.totalorder 1, %s14
      %p159 = scmp.lt.s32.totalorder %s14, 3
      %p160 = pnand %p158, %p159
      %p161 = pneg %p160
      // Predicated region
      $region9: #{tpu_custom_call.1} parent=5 // pred_check
        _
      $region10: #{tpu_custom_call.1} parent=5 // pred_check_branch
        %163 = sbr.rel (%p160) target = $region12
      $region11: #{tpu_custom_call.1} parent=5 // pred_region
        %s164 = ssub.s32 %s14, 1
        // Predicated region
        $region13: #{tpu_custom_call.1} parent=11 // pred_check
          %p165 = pneg %p61
        $region14: #{tpu_custom_call.1} parent=11 // pred_check_branch
          %167 = sbr.rel (%p165) target = $region16
        $region15: #{tpu_custom_call.1} parent=11 // pred_region
          _
        $region16: #{tpu_custom_call.1} parent=11 // pred_fallthru
          _
        // Predicated region
        $region17: #{tpu_custom_call.1} parent=11 // pred_check
          %p168 = pneg %p82
        $region18: #{tpu_custom_call.1} parent=11 // pred_check_branch
          %170 = sbr.rel (%p168) target = $region20
        $region19: #{tpu_custom_call.1} parent=11 // pred_region
          _
        $region20: #{tpu_custom_call.1} parent=11 // pred_fallthru
          _
        // Predicated region
        $region21: #{tpu_custom_call.1} parent=11 // pred_check
          %p171 = pneg %p103
        $region22: #{tpu_custom_call.1} parent=11 // pred_check_branch
          %173 = sbr.rel (%p171) target = $region24
        $region23: #{tpu_custom_call.1} parent=11 // pred_region
          _
        $region24: #{tpu_custom_call.1} parent=11 // pred_fallthru
          _
        // Predicated region
        $region25: #{tpu_custom_call.1} parent=11 // pred_check
          %p174 = pneg %p124
        $region26: #{tpu_custom_call.1} parent=11 // pred_check_branch
          %176 = sbr.rel (%p174) target = $region28
        $region27: #{tpu_custom_call.1} parent=11 // pred_region
          _
        $region28: #{tpu_custom_call.1} parent=11 // pred_fallthru
          _
      $region12: #{tpu_custom_call.1} parent=5 // pred_fallthru
        _
      %p177 = scmp.lt.s32.totalorder %s14, 2
      // Predicated region
      $region29: #{tpu_custom_call.1} parent=5 // pred_check
        %p178 = pneg %p177
      $region30: #{tpu_custom_call.1} parent=5 // pred_check_branch
        %180 = sbr.rel (%p178) target = $region32
      $region31: #{tpu_custom_call.1} parent=5 // pred_region
        // Predicated region
        $region33: #{tpu_custom_call.1} parent=31 // pred_check
          %p181 = pneg %p34
        $region34: #{tpu_custom_call.1} parent=31 // pred_check_branch
          %183 = sbr.rel (%p181) target = $region36
        $region35: #{tpu_custom_call.1} parent=31 // pred_region
          %p184 = scmp.lt.s32.totalorder %s14, 1
          %s185 = scalar_select %p184, %s14, 1
          %s186 = smul.addr %s185, 16
          %s187 = smul.addr %s186, 8
          %s188 = scalar_lea.vmem %s0, %s187
        $region36: #{tpu_custom_call.1} parent=31 // pred_fallthru
          _
      $region32: #{tpu_custom_call.1} parent=5 // pred_fallthru
        _
      %p189 = scmp.le.s32.totalorder 1, %s14
      %p190 = scmp.lt.s32.totalorder %s14, 3
      %p191 = pnand %p189, %p190
      %p192 = pneg %p191
      // Predicated region
      $region37: #{tpu_custom_call.1} parent=5 // pred_check
        _
      $region38: #{tpu_custom_call.1} parent=5 // pred_check_branch
        %194 = sbr.rel (%p191) target = $region40
      $region39: #{tpu_custom_call.1} parent=5 // pred_region
        %s195 = ssub.s32 %s14, 1
        %p196 = scmp.lt.s32.totalorder %s19, 1
        %s197 = scalar_select %p196, %s19, 1
        %s198 = smul.addr %s197, 16
        %s199 = smul.addr %s198, 8
        %s200 = scalar_lea.vmem %s0, %s199
        %p201 = pneg %p40
        %p202 = pneg %p37
        %p203 = pneg %p61
        %p204 = pneg %p58
        %p205 = pneg %p82
        %p206 = pneg %p79
        %p207 = pneg %p103
        %p208 = pneg %p100
        %p209 = pneg %p124
        %p210 = pneg %p121
        %p211 = pneg %p150
        %p212 = pneg %p147
        %s213 = sand.u32 %s137, 1
        %s214 = scalar_lea.sflag [#allocation5], %s213
        %s215 = sand.u32 %s137, 1
        %s216 = smul.addr %s215, 128
        %s217 = scalar_lea.vmem [#allocation4], %s216
        %p218 = scmp.lt.s32.totalorder %s19, 1
        %s219 = scalar_select %p218, %s19, 1
        %s220 = smul.addr %s219, 16
        %s221 = smul.addr %s220, 8
        %s222 = scalar_lea.vmem %s0, %s221
        %v224 = vld [vmem:[%s222] sm:$0xff]
        %v225 = vld [vmem:[%s222 + $0x8] sm:$0xff]
        %v226 = vld [vmem:[%s222 + $0x10] sm:$0xff]
        %v227 = vld [vmem:[%s222 + $0x18] sm:$0xff]
        %v228 = vld [vmem:[%s222 + $0x20] sm:$0xff]
        %v229 = vld [vmem:[%s222 + $0x28] sm:$0xff]
        %v230 = vld [vmem:[%s222 + $0x30] sm:$0xff]
        %v231 = vld [vmem:[%s222 + $0x38] sm:$0xff]
        %v232 = vld [vmem:[%s222 + $0x40] sm:$0xff]
        %v233 = vld [vmem:[%s222 + $0x48] sm:$0xff]
        %v234 = vld [vmem:[%s222 + $0x50] sm:$0xff]
        %v235 = vld [vmem:[%s222 + $0x58] sm:$0xff]
        %v236 = vld [vmem:[%s222 + $0x60] sm:$0xff]
        %v237 = vld [vmem:[%s222 + $0x68] sm:$0xff]
        %v238 = vld [vmem:[%s222 + $0x70] sm:$0xff]
        %v239 = vld [vmem:[%s222 + $0x78] sm:$0xff]
        %v240 = vadd.f32 %v224, %v225
        %241 = vadd.xlane.f32.xlu0 %v240
        %v242 = vpop.xlane.xlu0 %241
        %v243 = vadd.f32 %v226, %v227
        %244 = vadd.xlane.f32.xlu0 %v243
        %v245 = vpop.xlane.xlu0 %244
        %v246 = vadd.f32 %v228, %v229
        %247 = vadd.xlane.f32.xlu0 %v246
        %v248 = vpop.xlane.xlu0 %247
        %v249 = vadd.f32 %v230, %v231
        %250 = vadd.xlane.f32.xlu0 %v249
        %v251 = vpop.xlane.xlu0 %250
        %v252 = vadd.f32 %v232, %v233
        %253 = vadd.xlane.f32.xlu0 %v252
        %v254 = vpop.xlane.xlu0 %253
        %v255 = vadd.f32 %v234, %v235
        %256 = vadd.xlane.f32.xlu0 %v255
        %v257 = vpop.xlane.xlu0 %256
        %v258 = vadd.f32 %v236, %v237
        %259 = vadd.xlane.f32.xlu0 %v258
        %v260 = vpop.xlane.xlu0 %259
        %v261 = vadd.f32 %v238, %v239
        %262 = vadd.xlane.f32.xlu0 %v261
        %v263 = vpop.xlane.xlu0 %262
        %v264 = vmul.f32 %v224, %v224
        %v265 = vmul.f32 %v225, %v225
        %v266 = vmul.f32 %v226, %v226
        %v267 = vmul.f32 %v227, %v227
        %v268 = vmul.f32 %v228, %v228
        %v269 = vmul.f32 %v229, %v229
        %v270 = vmul.f32 %v230, %v230
        %v271 = vmul.f32 %v231, %v231
        %v272 = vmul.f32 %v232, %v232
        %v273 = vmul.f32 %v233, %v233
        %v274 = vmul.f32 %v234, %v234
        %v275 = vmul.f32 %v235, %v235
        %v276 = vmul.f32 %v236, %v236
        %v277 = vmul.f32 %v237, %v237
        %v278 = vmul.f32 %v238, %v238
        %v279 = vmul.f32 %v239, %v239
        %v280 = vadd.f32 %v264, %v265
        %281 = vadd.xlane.f32.xlu0 %v280
        %v282 = vpop.xlane.xlu0 %281
        %v283 = vadd.f32 %v266, %v267
        %284 = vadd.xlane.f32.xlu0 %v283
        %v285 = vpop.xlane.xlu0 %284
        %v286 = vadd.f32 %v268, %v269
        %287 = vadd.xlane.f32.xlu0 %v286
        %v288 = vpop.xlane.xlu0 %287
        %v289 = vadd.f32 %v270, %v271
        %290 = vadd.xlane.f32.xlu0 %v289
        %v291 = vpop.xlane.xlu0 %290
        %v292 = vadd.f32 %v272, %v273
        %293 = vadd.xlane.f32.xlu0 %v292
        %v294 = vpop.xlane.xlu0 %293
        %v295 = vadd.f32 %v274, %v275
        %296 = vadd.xlane.f32.xlu0 %v295
        %v297 = vpop.xlane.xlu0 %296
        %v298 = vadd.f32 %v276, %v277
        %299 = vadd.xlane.f32.xlu0 %v298
        %v300 = vpop.xlane.xlu0 %299
        %v301 = vadd.f32 %v278, %v279
        %302 = vadd.xlane.f32.xlu0 %v301
        %v303 = vpop.xlane.xlu0 %302
        %v304 = vlaneseq
        %v305 = vshrl.u32 %v304, 7
        %v306 = vadd.s32 %v305, 8
        %v307 = vadd.s32 %v305, 16
        %v308 = vadd.s32 %v305, 24
        %v309 = vadd.s32 %v305, 32
        %v310 = vadd.s32 %v305, 40
        %v311 = vadd.s32 %v305, 48
        %v312 = vadd.s32 %v305, 56
        %v313 = vlaneseq
        %v314 = vand.u32 %v313, 127
        %v315 = vmul.u32 %v314, 2
        %vm316 = vcmp.ge.s32.totalorder %v305, %v315
        %vm317 = vcmp.ge.s32.totalorder %v306, %v315
        %vm318 = vcmp.ge.s32.totalorder %v307, %v315
        %vm319 = vcmp.ge.s32.totalorder %v308, %v315
        %vm320 = vcmp.ge.s32.totalorder %v309, %v315
        %vm321 = vcmp.ge.s32.totalorder %v310, %v315
        %vm322 = vcmp.ge.s32.totalorder %v311, %v315
        %vm323 = vcmp.ge.s32.totalorder %v312, %v315
        %v324 = vadd.s32 %v315, 2
        %vm325 = vcmp.lt.s32.totalorder %v305, %v324
        %vm326 = vcmp.lt.s32.totalorder %v306, %v324
        %vm327 = vcmp.lt.s32.totalorder %v307, %v324
        %vm328 = vcmp.lt.s32.totalorder %v308, %v324
        %vm329 = vcmp.lt.s32.totalorder %v309, %v324
        %vm330 = vcmp.lt.s32.totalorder %v310, %v324
        %vm331 = vcmp.lt.s32.totalorder %v311, %v324
        %vm332 = vcmp.lt.s32.totalorder %v312, %v324
        %vm333 = vmand %vm316, %vm325
        %vm334 = vmand %vm317, %vm326
        %vm335 = vmand %vm318, %vm327
        %vm336 = vmand %vm319, %vm328
        %vm337 = vmand %vm320, %vm329
        %vm338 = vmand %vm321, %vm330
        %vm339 = vmand %vm322, %vm331
        %vm340 = vmand %vm323, %vm332
        %v341 = vsel %vm333, 1, 0
        %v342 = vsel %vm334, 1, 0
        %v343 = vsel %vm335, 1, 0
        %v344 = vsel %vm336, 1, 0
        %v345 = vsel %vm337, 1, 0
        %v346 = vsel %vm338, 1, 0
        %v347 = vsel %vm339, 1, 0
        %v348 = vsel %vm340, 1, 0
        %v349 = vcvt.s32.f32 %v341
        %v350 = vcvt.s32.f32 %v342
        %v351 = vcvt.s32.f32 %v343
        %v352 = vcvt.s32.f32 %v344
        %v353 = vcvt.s32.f32 %v345
        %v354 = vcvt.s32.f32 %v346
        %v355 = vcvt.s32.f32 %v347
        %v356 = vcvt.s32.f32 %v348
        %357 = vxpose.xlu0.b32.start [1/16] %v349, 128
        %358 = vxpose.xlu0.b32.cont [2/16] %v350, 128
        %359 = vxpose.xlu0.b32.cont [3/16] %v351, 128
        %360 = vxpose.xlu0.b32.cont [4/16] %v352, 128
        %361 = vxpose.xlu0.b32.cont [5/16] %v353, 128
        %362 = vxpose.xlu0.b32.cont [6/16] %v354, 128
        %363 = vxpose.xlu0.b32.cont [7/16] %v355, 128
        %364 = vxpose.xlu0.b32.cont [8/16] %v356, 128
        %365 = vxpose.xlu0.b32.cont [9/16] 0.0, 128
        %366 = vxpose.xlu0.b32.cont [10/16] 0.0, 128
        %367 = vxpose.xlu0.b32.cont [11/16] 0.0, 128
        %368 = vxpose.xlu0.b32.cont [12/16] 0.0, 128
        %369 = vxpose.xlu0.b32.cont [13/16] 0.0, 128
        %370 = vxpose.xlu0.b32.cont [14/16] 0.0, 128
        %371 = vxpose.xlu0.b32.cont [15/16] 0.0, 128
        %372 = vxpose.xlu0.b32.end [16/16] 0.0, 128
        %v373 = vpop.trf.xlu0
        %v374 = vpop.trf.xlu0
        %v375 = vpop.trf.xlu0
        %v376 = vpop.trf.xlu0
        %v377 = vpop.trf.xlu0
        %v378 = vpop.trf.xlu0
        %v379 = vpop.trf.xlu0
        %v380 = vpop.trf.xlu0
        %v381 = vpop.trf.xlu0
        %v382 = vpop.trf.xlu0
        %v383 = vpop.trf.xlu0
        %v384 = vpop.trf.xlu0
        %v385 = vpop.trf.xlu0
        %v386 = vpop.trf.xlu0
        %v387 = vpop.trf.xlu0
        %v388 = vpop.trf.xlu0
        %vm389 = vcmask 523264
        %v391 = vsel %vm389, %v373, 0
        %v394 = vsel %vm389, %v374, 0
        %v397 = vsel %vm389, %v375, 0
        %v400 = vsel %vm389, %v376, 0
        %402 = vmatprep.subr.mxu0 0.0
        %403 = vmatpush1.msra.mxu0 0.0
        %404 = vmatprep.subr.mxu0 0.0
        %405 = vmatpush1.msra.mxu0 0.0
        %406 = vmatprep.subr.mxu0 0.0
        %407 = vmatpush1.msra.mxu0 0.0
        %408 = vmatprep.subr.mxu0 0.0
        %409 = vmatpush1.msra.mxu0 0.0
        %410 = vmatprep.subr.mxu0 0.0
        %411 = vmatpush1.msra.mxu0 0.0
        %412 = vmatprep.subr.mxu0 0.0
        %413 = vmatpush1.msra.mxu0 0.0
        %414 = vmatprep.subr.mxu0 0.0
        %415 = vmatpush1.msra.mxu0 0.0
        %416 = vmatprep.subr.mxu0 0.0
        %417 = vmatpush1.msra.mxu0 0.0
        %418 = vmatprep.subr.mxu0 0.0
        %419 = vmatpush1.msra.mxu0 %v263
        %420 = vmatprep.subr.mxu0 0.0
        %421 = vmatpush1.msra.mxu0 %v260
        %422 = vmatprep.subr.mxu0 0.0
        %423 = vmatpush1.msra.mxu0 %v257
        %424 = vmatprep.subr.mxu0 0.0
        %425 = vmatpush1.msra.mxu0 %v254
        %426 = vmatprep.subr.mxu0 0.0
        %427 = vmatpush1.msra.mxu0 %v251
        %428 = vmatprep.subr.mxu0 0.0
        %429 = vmatpush1.msra.mxu0 %v248
        %430 = vmatprep.subr.mxu0 0.0
        %431 = vmatpush1.msra.mxu0 %v245
        %432 = vmatprep.subr.mxu0 0.0
        %433 = vmatpush1.msra.mxu0 %v242
        %434 = vmatprep.subr.mxu0 0.0
        %435 = vmatpush2.msra.mxu0 0.0
        %436 = vmatprep.subr.mxu0 0.0
        %437 = vmatpush2.msra.mxu0 0.0
        %438 = vmatprep.subr.mxu0 0.0
        %439 = vmatpush2.msra.mxu0 0.0
        %440 = vmatprep.subr.mxu0 0.0
        %441 = vmatpush2.msra.mxu0 0.0
        %442 = vmatprep.subr.mxu0 0.0
        %443 = vmatpush2.msra.mxu0 0.0
        %444 = vmatprep.subr.mxu0 0.0
        %445 = vmatpush2.msra.mxu0 0.0
        %446 = vmatprep.subr.mxu0 0.0
        %447 = vmatpush2.msra.mxu0 0.0
        %448 = vmatprep.subr.mxu0 0.0
        %449 = vmatpush2.msra.mxu0 0.0
        %450 = vmatprep.subr.mxu0 0.0
        %451 = vmatpush2.msra.mxu0 0.0
        %452 = vmatprep.subr.mxu0 0.0
        %453 = vmatpush2.msra.mxu0 0.0
        %454 = vmatprep.subr.mxu0 0.0
        %455 = vmatpush2.msra.mxu0 0.0
        %456 = vmatprep.subr.mxu0 0.0
        %457 = vmatpush2.msra.mxu0 0.0
        %458 = vmatprep.subr.mxu0 0.0
        %459 = vmatpush2.msra.mxu0 0.0
        %460 = vmatprep.subr.mxu0 0.0
        %461 = vmatpush2.msra.mxu0 0.0
        %462 = vmatprep.subr.mxu0 0.0
        %463 = vmatpush2.msra.mxu0 0.0
        %464 = vmatprep.subr.mxu0 0.0
        %465 = vmatpush2.msra.mxu0 0.0
        %466 = vmatprep.mubr.f32.mxu0 0.0
        %467 = vmatmul.mubr.f32.gmra.mxu0 %v391
        %v468 = vpop.f32.mrf.mxu0
        %v469 = vadd.f32 0.0, %v468
        %v470 = vpop.f32.mrf.mxu0
        %471 = vmatprep.mubr.f32.mxu0 0.0
        %472 = vmatmul.mubr.f32.gmra.mxu0 %v394
        %v473 = vpop.f32.mrf.mxu0
        %v474 = vadd.f32 0.0, %v473
        %v475 = vpop.f32.mrf.mxu0
        %476 = vmatprep.mubr.f32.mxu0 0.0
        %477 = vmatmul.mubr.f32.gmra.mxu0 %v397
        %v478 = vpop.f32.mrf.mxu0
        %v479 = vadd.f32 0.0, %v478
        %v480 = vpop.f32.mrf.mxu0
        %481 = vmatprep.mubr.f32.mxu0 0.0
        %482 = vmatmul.mubr.f32.gmra.mxu0 %v400
        %v483 = vpop.f32.mrf.mxu0
        %v484 = vadd.f32 0.0, %v483
        %v485 = vpop.f32.mrf.mxu0
        %486 = vdwg.mxu0
        %487 = vmatprep.subr.mxu0 0.0
        %488 = vmatpush1.msra.mxu0 0.0
        %489 = vmatprep.subr.mxu0 0.0
        %490 = vmatpush1.msra.mxu0 0.0
        %491 = vmatprep.subr.mxu0 0.0
        %492 = vmatpush1.msra.mxu0 0.0
        %493 = vmatprep.subr.mxu0 0.0
        %494 = vmatpush1.msra.mxu0 0.0
        %495 = vmatprep.subr.mxu0 0.0
        %496 = vmatpush1.msra.mxu0 0.0
        %497 = vmatprep.subr.mxu0 0.0
        %498 = vmatpush1.msra.mxu0 0.0
        %499 = vmatprep.subr.mxu0 0.0
        %500 = vmatpush1.msra.mxu0 0.0
        %501 = vmatprep.subr.mxu0 0.0
        %502 = vmatpush1.msra.mxu0 0.0
        %503 = vmatprep.subr.mxu0 0.0
        %504 = vmatpush1.msra.mxu0 %v303
        %505 = vmatprep.subr.mxu0 0.0
        %506 = vmatpush1.msra.mxu0 %v300
        %507 = vmatprep.subr.mxu0 0.0
        %508 = vmatpush1.msra.mxu0 %v297
        %509 = vmatprep.subr.mxu0 0.0
        %510 = vmatpush1.msra.mxu0 %v294
        %511 = vmatprep.subr.mxu0 0.0
        %512 = vmatpush1.msra.mxu0 %v291
        %513 = vmatprep.subr.mxu0 0.0
        %514 = vmatpush1.msra.mxu0 %v288
        %515 = vmatprep.subr.mxu0 0.0
        %516 = vmatpush1.msra.mxu0 %v285
        %517 = vmatprep.subr.mxu0 0.0
        %518 = vmatpush1.msra.mxu0 %v282
        %519 = vmatprep.subr.mxu0 0.0
        %520 = vmatpush2.msra.mxu0 0.0
        %521 = vmatprep.subr.mxu0 0.0
        %522 = vmatpush2.msra.mxu0 0.0
        %523 = vmatprep.subr.mxu0 0.0
        %524 = vmatpush2.msra.mxu0 0.0
        %525 = vmatprep.subr.mxu0 0.0
        %526 = vmatpush2.msra.mxu0 0.0
        %527 = vmatprep.subr.mxu0 0.0
        %528 = vmatpush2.msra.mxu0 0.0
        %529 = vmatprep.subr.mxu0 0.0
        %530 = vmatpush2.msra.mxu0 0.0
        %531 = vmatprep.subr.mxu0 0.0
        %532 = vmatpush2.msra.mxu0 0.0
        %533 = vmatprep.subr.mxu0 0.0
        %534 = vmatpush2.msra.mxu0 0.0
        %535 = vmatprep.subr.mxu0 0.0
        %536 = vmatpush2.msra.mxu0 0.0
        %537 = vmatprep.subr.mxu0 0.0
        %538 = vmatpush2.msra.mxu0 0.0
        %539 = vmatprep.subr.mxu0 0.0
        %540 = vmatpush2.msra.mxu0 0.0
        %541 = vmatprep.subr.mxu0 0.0
        %542 = vmatpush2.msra.mxu0 0.0
        %543 = vmatprep.subr.mxu0 0.0
        %544 = vmatpush2.msra.mxu0 0.0
        %545 = vmatprep.subr.mxu0 0.0
        %546 = vmatpush2.msra.mxu0 0.0
        %547 = vmatprep.subr.mxu0 0.0
        %548 = vmatpush2.msra.mxu0 0.0
        %549 = vmatprep.subr.mxu0 0.0
        %550 = vmatpush2.msra.mxu0 0.0
        %551 = vmatprep.mubr.f32.mxu0 0.0
        %552 = vmatmul.mubr.f32.gmra.mxu0 %v391
        %v553 = vpop.f32.mrf.mxu0
        %v554 = vadd.f32 0.0, %v553
        %v555 = vpop.f32.mrf.mxu0
        %556 = vmatprep.mubr.f32.mxu0 0.0
        %557 = vmatmul.mubr.f32.gmra.mxu0 %v394
        %v558 = vpop.f32.mrf.mxu0
        %v559 = vadd.f32 0.0, %v558
        %v560 = vpop.f32.mrf.mxu0
        %561 = vmatprep.mubr.f32.mxu0 0.0
        %562 = vmatmul.mubr.f32.gmra.mxu0 %v397
        %v563 = vpop.f32.mrf.mxu0
        %v564 = vadd.f32 0.0, %v563
        %v565 = vpop.f32.mrf.mxu0
        %566 = vmatprep.mubr.f32.mxu0 0.0
        %567 = vmatmul.mubr.f32.gmra.mxu0 %v400
        %v568 = vpop.f32.mrf.mxu0
        %v569 = vadd.f32 0.0, %v568
        %v570 = vpop.f32.mrf.mxu0
        %571 = vdwg.mxu0
        %v572 = vmul.f32 %v469, 0.001953125
        %v573 = vmul.f32 %v474, 0.001953125
        %v574 = vmul.f32 %v479, 0.001953125
        %v575 = vmul.f32 %v484, 0.001953125
        %v576 = vmul.f32 %v554, 0.001953125
        %v577 = vmul.f32 %v559, 0.001953125
        %v578 = vmul.f32 %v564, 0.001953125
        %v579 = vmul.f32 %v569, 0.001953125
        %v580 = vmul.f32 %v572, %v572
        %v581 = vmul.f32 %v573, %v573
        %v582 = vmul.f32 %v574, %v574
        %v583 = vmul.f32 %v575, %v575
        %v584 = vsub.f32 %v576, %v580
        %v585 = vsub.f32 %v577, %v581
        %v586 = vsub.f32 %v578, %v582
        %v587 = vsub.f32 %v579, %v583
        %v588 = vmax.f32 %v584, 0.0
        %v589 = vmax.f32 %v585, 0.0
        %v590 = vmax.f32 %v586, 0.0
        %v591 = vmax.f32 %v587, 0.0
        %v592 = vadd.f32 %v588, 1e-05
        %v593 = vadd.f32 %v589, 1e-05
        %v594 = vadd.f32 %v590, 1e-05
        %v595 = vadd.f32 %v591, 1e-05
        %v596 = vrsqrt.pop %v592
        %v597 = vrsqrt.pop %v593
        %v598 = vrsqrt.pop %v594
        %v599 = vrsqrt.pop %v595
        %vm600 = vcmask 261120
        %v602 = vsel %vm600, %v349, 0
        %v605 = vsel %vm600, %v350, 0
        %v608 = vsel %vm600, %v351, 0
        %v611 = vsel %vm600, %v352, 0
        %v614 = vsel %vm600, %v353, 0
        %v617 = vsel %vm600, %v354, 0
        %v620 = vsel %vm600, %v355, 0
        %v623 = vsel %vm600, %v356, 0
        %625 = vmatprep.subr.mxu0 0.0
        %626 = vmatpush1.msra.mxu0 0.0
        %627 = vmatprep.subr.mxu0 0.0
        %628 = vmatpush1.msra.mxu0 0.0
        %629 = vmatprep.subr.mxu0 0.0
        %630 = vmatpush1.msra.mxu0 0.0
        %631 = vmatprep.subr.mxu0 0.0
        %632 = vmatpush1.msra.mxu0 0.0
        %633 = vmatprep.subr.mxu0 0.0
        %634 = vmatpush1.msra.mxu0 0.0
        %635 = vmatprep.subr.mxu0 0.0
        %636 = vmatpush1.msra.mxu0 0.0
        %637 = vmatprep.subr.mxu0 0.0
        %638 = vmatpush1.msra.mxu0 0.0
        %639 = vmatprep.subr.mxu0 0.0
        %640 = vmatpush1.msra.mxu0 0.0
        %641 = vmatprep.subr.mxu0 0.0
        %642 = vmatpush1.msra.mxu0 0.0
        %643 = vmatprep.subr.mxu0 0.0
        %644 = vmatpush1.msra.mxu0 0.0
        %645 = vmatprep.subr.mxu0 0.0
        %646 = vmatpush1.msra.mxu0 0.0
        %647 = vmatprep.subr.mxu0 0.0
        %648 = vmatpush1.msra.mxu0 0.0
        %649 = vmatprep.subr.mxu0 0.0
        %650 = vmatpush1.msra.mxu0 %v575
        %651 = vmatprep.subr.mxu0 0.0
        %652 = vmatpush1.msra.mxu0 %v574
        %653 = vmatprep.subr.mxu0 0.0
        %654 = vmatpush1.msra.mxu0 %v573
        %655 = vmatprep.subr.mxu0 0.0
        %656 = vmatpush1.msra.mxu0 %v572
        %657 = vmatprep.subr.mxu0 0.0
        %658 = vmatpush2.msra.mxu0 0.0
        %659 = vmatprep.subr.mxu0 0.0
        %660 = vmatpush2.msra.mxu0 0.0
        %661 = vmatprep.subr.mxu0 0.0
        %662 = vmatpush2.msra.mxu0 0.0
        %663 = vmatprep.subr.mxu0 0.0
        %664 = vmatpush2.msra.mxu0 0.0
        %665 = vmatprep.subr.mxu0 0.0
        %666 = vmatpush2.msra.mxu0 0.0
        %667 = vmatprep.subr.mxu0 0.0
        %668 = vmatpush2.msra.mxu0 0.0
        %669 = vmatprep.subr.mxu0 0.0
        %670 = vmatpush2.msra.mxu0 0.0
        %671 = vmatprep.subr.mxu0 0.0
        %672 = vmatpush2.msra.mxu0 0.0
        %673 = vmatprep.subr.mxu0 0.0
        %674 = vmatpush2.msra.mxu0 0.0
        %675 = vmatprep.subr.mxu0 0.0
        %676 = vmatpush2.msra.mxu0 0.0
        %677 = vmatprep.subr.mxu0 0.0
        %678 = vmatpush2.msra.mxu0 0.0
        %679 = vmatprep.subr.mxu0 0.0
        %680 = vmatpush2.msra.mxu0 0.0
        %681 = vmatprep.subr.mxu0 0.0
        %682 = vmatpush2.msra.mxu0 0.0
        %683 = vmatprep.subr.mxu0 0.0
        %684 = vmatpush2.msra.mxu0 0.0
        %685 = vmatprep.subr.mxu0 0.0
        %686 = vmatpush2.msra.mxu0 0.0
        %687 = vmatprep.subr.mxu0 0.0
        %688 = vmatpush2.msra.mxu0 0.0
        %689 = vmatprep.mubr.f32.mxu0 0.0
        %690 = vmatmul.mubr.f32.gmra.mxu0 %v602
        %v691 = vpop.f32.mrf.mxu0
        %v692 = vadd.f32 0.0, %v691
        %v693 = vpop.f32.mrf.mxu0
        %694 = vmatprep.mubr.f32.mxu0 0.0
        %695 = vmatmul.mubr.f32.gmra.mxu0 %v605
        %v696 = vpop.f32.mrf.mxu0
        %v697 = vadd.f32 0.0, %v696
        %v698 = vpop.f32.mrf.mxu0
        %699 = vmatprep.mubr.f32.mxu0 0.0
        %700 = vmatmul.mubr.f32.gmra.mxu0 %v608
        %v701 = vpop.f32.mrf.mxu0
        %v702 = vadd.f32 0.0, %v701
        %v703 = vpop.f32.mrf.mxu0
        %704 = vmatprep.mubr.f32.mxu0 0.0
        %705 = vmatmul.mubr.f32.gmra.mxu0 %v611
        %v706 = vpop.f32.mrf.mxu0
        %v707 = vadd.f32 0.0, %v706
        %v708 = vpop.f32.mrf.mxu0
        %709 = vmatprep.mubr.f32.mxu0 0.0
        %710 = vmatmul.mubr.f32.gmra.mxu0 %v614
        %v711 = vpop.f32.mrf.mxu0
        %v712 = vadd.f32 0.0, %v711
        %v713 = vpop.f32.mrf.mxu0
        %714 = vmatprep.mubr.f32.mxu0 0.0
        %715 = vmatmul.mubr.f32.gmra.mxu0 %v617
        %v716 = vpop.f32.mrf.mxu0
        %v717 = vadd.f32 0.0, %v716
        %v718 = vpop.f32.mrf.mxu0
        %719 = vmatprep.mubr.f32.mxu0 0.0
        %720 = vmatmul.mubr.f32.gmra.mxu0 %v620
        %v721 = vpop.f32.mrf.mxu0
        %v722 = vadd.f32 0.0, %v721
        %v723 = vpop.f32.mrf.mxu0
        %724 = vmatprep.mubr.f32.mxu0 0.0
        %725 = vmatmul.mubr.f32.gmra.mxu0 %v623
        %v726 = vpop.f32.mrf.mxu0
        %v727 = vadd.f32 0.0, %v726
        %v728 = vpop.f32.mrf.mxu0
        %729 = vdwg.mxu0
        %730 = vmatprep.subr.mxu0 0.0
        %731 = vmatpush1.msra.mxu0 0.0
        %732 = vmatprep.subr.mxu0 0.0
        %733 = vmatpush1.msra.mxu0 0.0
        %734 = vmatprep.subr.mxu0 0.0
        %735 = vmatpush1.msra.mxu0 0.0
        %736 = vmatprep.subr.mxu0 0.0
        %737 = vmatpush1.msra.mxu0 0.0
        %738 = vmatprep.subr.mxu0 0.0
        %739 = vmatpush1.msra.mxu0 0.0
        %740 = vmatprep.subr.mxu0 0.0
        %741 = vmatpush1.msra.mxu0 0.0
        %742 = vmatprep.subr.mxu0 0.0
        %743 = vmatpush1.msra.mxu0 0.0
        %744 = vmatprep.subr.mxu0 0.0
        %745 = vmatpush1.msra.mxu0 0.0
        %746 = vmatprep.subr.mxu0 0.0
        %747 = vmatpush1.msra.mxu0 0.0
        %748 = vmatprep.subr.mxu0 0.0
        %749 = vmatpush1.msra.mxu0 0.0
        %750 = vmatprep.subr.mxu0 0.0
        %751 = vmatpush1.msra.mxu0 0.0
        %752 = vmatprep.subr.mxu0 0.0
        %753 = vmatpush1.msra.mxu0 0.0
        %754 = vmatprep.subr.mxu0 0.0
        %755 = vmatpush1.msra.mxu0 %v599
        %756 = vmatprep.subr.mxu0 0.0
        %757 = vmatpush1.msra.mxu0 %v598
        %758 = vmatprep.subr.mxu0 0.0
        %759 = vmatpush1.msra.mxu0 %v597
        %760 = vmatprep.subr.mxu0 0.0
        %761 = vmatpush1.msra.mxu0 %v596
        %762 = vmatprep.subr.mxu0 0.0
        %763 = vmatpush2.msra.mxu0 0.0
        %764 = vmatprep.subr.mxu0 0.0
        %765 = vmatpush2.msra.mxu0 0.0
        %766 = vmatprep.subr.mxu0 0.0
        %767 = vmatpush2.msra.mxu0 0.0
        %768 = vmatprep.subr.mxu0 0.0
        %769 = vmatpush2.msra.mxu0 0.0
        %770 = vmatprep.subr.mxu0 0.0
        %771 = vmatpush2.msra.mxu0 0.0
        %772 = vmatprep.subr.mxu0 0.0
        %773 = vmatpush2.msra.mxu0 0.0
        %774 = vmatprep.subr.mxu0 0.0
        %775 = vmatpush2.msra.mxu0 0.0
        %776 = vmatprep.subr.mxu0 0.0
        %777 = vmatpush2.msra.mxu0 0.0
        %778 = vmatprep.subr.mxu0 0.0
        %779 = vmatpush2.msra.mxu0 0.0
        %780 = vmatprep.subr.mxu0 0.0
        %781 = vmatpush2.msra.mxu0 0.0
        %782 = vmatprep.subr.mxu0 0.0
        %783 = vmatpush2.msra.mxu0 0.0
        %784 = vmatprep.subr.mxu0 0.0
        %785 = vmatpush2.msra.mxu0 0.0
        %786 = vmatprep.subr.mxu0 0.0
        %787 = vmatpush2.msra.mxu0 0.0
        %788 = vmatprep.subr.mxu0 0.0
        %789 = vmatpush2.msra.mxu0 0.0
        %790 = vmatprep.subr.mxu0 0.0
        %791 = vmatpush2.msra.mxu0 0.0
        %792 = vmatprep.subr.mxu0 0.0
        %793 = vmatpush2.msra.mxu0 0.0
        %794 = vmatprep.mubr.f32.mxu0 0.0
        %795 = vmatmul.mubr.f32.gmra.mxu0 %v602
        %v796 = vpop.f32.mrf.mxu0
        %v797 = vadd.f32 0.0, %v796
        %v798 = vpop.f32.mrf.mxu0
        %799 = vmatprep.mubr.f32.mxu0 0.0
        %800 = vmatmul.mubr.f32.gmra.mxu0 %v605
        %v801 = vpop.f32.mrf.mxu0
        %v802 = vadd.f32 0.0, %v801
        %v803 = vpop.f32.mrf.mxu0
        %804 = vmatprep.mubr.f32.mxu0 0.0
        %805 = vmatmul.mubr.f32.gmra.mxu0 %v608
        %v806 = vpop.f32.mrf.mxu0
        %v807 = vadd.f32 0.0, %v806
        %v808 = vpop.f32.mrf.mxu0
        %809 = vmatprep.mubr.f32.mxu0 0.0
        %810 = vmatmul.mubr.f32.gmra.mxu0 %v611
        %v811 = vpop.f32.mrf.mxu0
        %v812 = vadd.f32 0.0, %v811
        %v813 = vpop.f32.mrf.mxu0
        %814 = vmatprep.mubr.f32.mxu0 0.0
        %815 = vmatmul.mubr.f32.gmra.mxu0 %v614
        %v816 = vpop.f32.mrf.mxu0
        %v817 = vadd.f32 0.0, %v816
        %v818 = vpop.f32.mrf.mxu0
        %819 = vmatprep.mubr.f32.mxu0 0.0
        %820 = vmatmul.mubr.f32.gmra.mxu0 %v617
        %v821 = vpop.f32.mrf.mxu0
        %v822 = vadd.f32 0.0, %v821
        %v823 = vpop.f32.mrf.mxu0
        %824 = vmatprep.mubr.f32.mxu0 0.0
        %825 = vmatmul.mubr.f32.gmra.mxu0 %v620
        %v826 = vpop.f32.mrf.mxu0
        %v827 = vadd.f32 0.0, %v826
        %v828 = vpop.f32.mrf.mxu0
        %829 = vmatprep.mubr.f32.mxu0 0.0
        %830 = vmatmul.mubr.f32.gmra.mxu0 %v623
        %v831 = vpop.f32.mrf.mxu0
        %v832 = vadd.f32 0.0, %v831
        %v833 = vpop.f32.mrf.mxu0
        %834 = vdwg.mxu0
        %836 = vset.pattern.permute.xlu0 0
        %837 = vperm.xlu0 %836, %v692
        %v838 = vpop.permute.xlu0 %837
        %841 = vset.pattern.permute.xlu0 0
        %842 = vperm.xlu0 %841, %v697
        %v843 = vpop.permute.xlu0 %842
        %846 = vset.pattern.permute.xlu0 0
        %847 = vperm.xlu0 %846, %v702
        %v848 = vpop.permute.xlu0 %847
        %851 = vset.pattern.permute.xlu0 0
        %852 = vperm.xlu0 %851, %v707
        %v853 = vpop.permute.xlu0 %852
        %856 = vset.pattern.permute.xlu0 0
        %857 = vperm.xlu0 %856, %v712
        %v858 = vpop.permute.xlu0 %857
        %861 = vset.pattern.permute.xlu0 0
        %862 = vperm.xlu0 %861, %v717
        %v863 = vpop.permute.xlu0 %862
        %866 = vset.pattern.permute.xlu0 0
        %867 = vperm.xlu0 %866, %v722
        %v868 = vpop.permute.xlu0 %867
        %871 = vset.pattern.permute.xlu0 0
        %872 = vperm.xlu0 %871, %v727
        %v873 = vpop.permute.xlu0 %872
        %v875 = vsub.f32 %v224, %v838
        %v876 = vsub.f32 %v225, %v838
        %v877 = vsub.f32 %v226, %v843
        %v878 = vsub.f32 %v227, %v843
        %v879 = vsub.f32 %v228, %v848
        %v880 = vsub.f32 %v229, %v848
        %v881 = vsub.f32 %v230, %v853
        %v882 = vsub.f32 %v231, %v853
        %v883 = vsub.f32 %v232, %v858
        %v884 = vsub.f32 %v233, %v858
        %v885 = vsub.f32 %v234, %v863
        %v886 = vsub.f32 %v235, %v863
        %v887 = vsub.f32 %v236, %v868
        %v888 = vsub.f32 %v237, %v868
        %v889 = vsub.f32 %v238, %v873
        %v890 = vsub.f32 %v239, %v873
        %892 = vset.pattern.permute.xlu0 0
        %893 = vperm.xlu0 %892, %v797
        %v894 = vpop.permute.xlu0 %893
        %897 = vset.pattern.permute.xlu0 0
        %898 = vperm.xlu0 %897, %v802
        %v899 = vpop.permute.xlu0 %898
        %902 = vset.pattern.permute.xlu0 0
        %903 = vperm.xlu0 %902, %v807
        %v904 = vpop.permute.xlu0 %903
        %907 = vset.pattern.permute.xlu0 0
        %908 = vperm.xlu0 %907, %v812
        %v909 = vpop.permute.xlu0 %908
        %912 = vset.pattern.permute.xlu0 0
        %913 = vperm.xlu0 %912, %v817
        %v914 = vpop.permute.xlu0 %913
        %917 = vset.pattern.permute.xlu0 0
        %918 = vperm.xlu0 %917, %v822
        %v919 = vpop.permute.xlu0 %918
        %922 = vset.pattern.permute.xlu0 0
        %923 = vperm.xlu0 %922, %v827
        %v924 = vpop.permute.xlu0 %923
        %927 = vset.pattern.permute.xlu0 0
        %928 = vperm.xlu0 %927, %v832
        %v929 = vpop.permute.xlu0 %928
        %v931 = vmul.f32 %v875, %v894
        %v932 = vmul.f32 %v876, %v894
        %v933 = vmul.f32 %v877, %v899
        %v934 = vmul.f32 %v878, %v899
        %v935 = vmul.f32 %v879, %v904
        %v936 = vmul.f32 %v880, %v904
        %v937 = vmul.f32 %v881, %v909
        %v938 = vmul.f32 %v882, %v909
        %v939 = vmul.f32 %v883, %v914
        %v940 = vmul.f32 %v884, %v914
        %v941 = vmul.f32 %v885, %v919
        %v942 = vmul.f32 %v886, %v919
        %v943 = vmul.f32 %v887, %v924
        %v944 = vmul.f32 %v888, %v924
        %v945 = vmul.f32 %v889, %v929
        %v946 = vmul.f32 %v890, %v929
        %v947 = vpack.c.bf16 %v933, %v931
        %v948 = vpack.c.bf16 %v934, %v932
        %v949 = vpack.c.bf16 %v937, %v935
        %v950 = vpack.c.bf16 %v938, %v936
        %v951 = vpack.c.bf16 %v941, %v939
        %v952 = vpack.c.bf16 %v942, %v940
        %v953 = vpack.c.bf16 %v945, %v943
        %v954 = vpack.c.bf16 %v946, %v944
        %v955 = vld [vmem:[%s1] sm:$0xf]
        %v956 = vld [vmem:[%s1 + $0x4] sm:$0xf]
        %v957 = vld [vmem:[%s1 + $0x8] sm:$0xf]
        %v958 = vld [vmem:[%s1 + $0xc] sm:$0xf]
        %v959 = vld [vmem:[%s1 + $0x10] sm:$0xf]
        %v960 = vld [vmem:[%s1 + $0x14] sm:$0xf]
        %v961 = vld [vmem:[%s1 + $0x18] sm:$0xf]
        %v962 = vld [vmem:[%s1 + $0x1c] sm:$0xf]
        %v963 = vld [vmem:[%s1 + $0x20] sm:$0xf]
        %v964 = vld [vmem:[%s1 + $0x24] sm:$0xf]
        %v965 = vld [vmem:[%s1 + $0x28] sm:$0xf]
        %v966 = vld [vmem:[%s1 + $0x2c] sm:$0xf]
        %v967 = vld [vmem:[%s1 + $0x30] sm:$0xf]
        %v968 = vld [vmem:[%s1 + $0x34] sm:$0xf]
        %v969 = vld [vmem:[%s1 + $0x38] sm:$0xf]
        %v970 = vld [vmem:[%s1 + $0x3c] sm:$0xf]
        %v971 = vld [vmem:[%s1 + $0x40] sm:$0xf]
        %v972 = vld [vmem:[%s1 + $0x44] sm:$0xf]
        %v973 = vld [vmem:[%s1 + $0x48] sm:$0xf]
        %v974 = vld [vmem:[%s1 + $0x4c] sm:$0xf]
        %v975 = vld [vmem:[%s1 + $0x50] sm:$0xf]
        %v976 = vld [vmem:[%s1 + $0x54] sm:$0xf]
        %v977 = vld [vmem:[%s1 + $0x58] sm:$0xf]
        %v978 = vld [vmem:[%s1 + $0x5c] sm:$0xf]
        %v979 = vld [vmem:[%s2] sm:$0xff]
        %v980 = vld [vmem:[%s2 + $0x8] sm:$0xff]
        %v981 = vld [vmem:[%s2 + $0x10] sm:$0xff]
        %v982 = vld [vmem:[%s2 + $0x18] sm:$0xff]
        %v983 = vld [vmem:[%s2 + $0x20] sm:$0xff]
        %v984 = vld [vmem:[%s2 + $0x28] sm:$0xff]
        %v985 = vld [vmem:[%s2 + $0x30] sm:$0xff]
        %v986 = vld [vmem:[%s2 + $0x38] sm:$0xff]
        %v987 = vld [vmem:[%s2 + $0x40] sm:$0xff]
        %v988 = vld [vmem:[%s2 + $0x48] sm:$0xff]
        %v989 = vld [vmem:[%s2 + $0x50] sm:$0xff]
        %v990 = vld [vmem:[%s2 + $0x58] sm:$0xff]
        %v991 = vld [vmem:[%s2 + $0x60] sm:$0xff]
        %v992 = vld [vmem:[%s2 + $0x68] sm:$0xff]
        %v993 = vld [vmem:[%s2 + $0x70] sm:$0xff]
        %v994 = vld [vmem:[%s2 + $0x78] sm:$0xff]
        %v995 = vld [vmem:[%s2 + $0x80] sm:$0xff]
        %v996 = vld [vmem:[%s2 + $0x88] sm:$0xff]
        %v997 = vld [vmem:[%s2 + $0x90] sm:$0xff]
        %v998 = vld [vmem:[%s2 + $0x98] sm:$0xff]
        %v999 = vld [vmem:[%s2 + $0xa0] sm:$0xff]
        %v1000 = vld [vmem:[%s2 + $0xa8] sm:$0xff]
        %v1001 = vld [vmem:[%s2 + $0xb0] sm:$0xff]
        %v1002 = vld [vmem:[%s2 + $0xb8] sm:$0xff]
        %1004 = vset.pattern.permute.xlu0 0
        %1005 = vperm.xlu0 %1004, %v979
        %v1006 = vpop.permute.xlu0 %1005
        %1009 = vset.pattern.permute.xlu0 0
        %1010 = vperm.xlu0 %1009, %v980
        %v1011 = vpop.permute.xlu0 %1010
        %1014 = vset.pattern.permute.xlu0 0
        %1015 = vperm.xlu0 %1014, %v981
        %v1016 = vpop.permute.xlu0 %1015
        %1019 = vset.pattern.permute.xlu0 0
        %1020 = vperm.xlu0 %1019, %v982
        %v1021 = vpop.permute.xlu0 %1020
        %1024 = vset.pattern.permute.xlu0 0
        %1025 = vperm.xlu0 %1024, %v983
        %v1026 = vpop.permute.xlu0 %1025
        %1029 = vset.pattern.permute.xlu0 0
        %1030 = vperm.xlu0 %1029, %v984
        %v1031 = vpop.permute.xlu0 %1030
        %1034 = vset.pattern.permute.xlu0 0
        %1035 = vperm.xlu0 %1034, %v985
        %v1036 = vpop.permute.xlu0 %1035
        %1039 = vset.pattern.permute.xlu0 0
        %1040 = vperm.xlu0 %1039, %v986
        %v1041 = vpop.permute.xlu0 %1040
        %1044 = vset.pattern.permute.xlu0 0
        %1045 = vperm.xlu0 %1044, %v987
        %v1046 = vpop.permute.xlu0 %1045
        %1049 = vset.pattern.permute.xlu0 0
        %1050 = vperm.xlu0 %1049, %v988
        %v1051 = vpop.permute.xlu0 %1050
        %1054 = vset.pattern.permute.xlu0 0
        %1055 = vperm.xlu0 %1054, %v989
        %v1056 = vpop.permute.xlu0 %1055
        %1059 = vset.pattern.permute.xlu0 0
        %1060 = vperm.xlu0 %1059, %v990
        %v1061 = vpop.permute.xlu0 %1060
        %1064 = vset.pattern.permute.xlu0 0
        %1065 = vperm.xlu0 %1064, %v991
        %v1066 = vpop.permute.xlu0 %1065
        %1069 = vset.pattern.permute.xlu0 0
        %1070 = vperm.xlu0 %1069, %v992
        %v1071 = vpop.permute.xlu0 %1070
        %1074 = vset.pattern.permute.xlu0 0
        %1075 = vperm.xlu0 %1074, %v993
        %v1076 = vpop.permute.xlu0 %1075
        %1079 = vset.pattern.permute.xlu0 0
        %1080 = vperm.xlu0 %1079, %v994
        %v1081 = vpop.permute.xlu0 %1080
        %1084 = vset.pattern.permute.xlu0 0
        %1085 = vperm.xlu0 %1084, %v995
        %v1086 = vpop.permute.xlu0 %1085
        %1089 = vset.pattern.permute.xlu0 0
        %1090 = vperm.xlu0 %1089, %v996
        %v1091 = vpop.permute.xlu0 %1090
        %1094 = vset.pattern.permute.xlu0 0
        %1095 = vperm.xlu0 %1094, %v997
        %v1096 = vpop.permute.xlu0 %1095
        %1099 = vset.pattern.permute.xlu0 0
        %1100 = vperm.xlu0 %1099, %v998
        %v1101 = vpop.permute.xlu0 %1100
        %1104 = vset.pattern.permute.xlu0 0
        %1105 = vperm.xlu0 %1104, %v999
        %v1106 = vpop.permute.xlu0 %1105
        %1109 = vset.pattern.permute.xlu0 0
        %1110 = vperm.xlu0 %1109, %v1000
        %v1111 = vpop.permute.xlu0 %1110
        %1114 = vset.pattern.permute.xlu0 0
        %1115 = vperm.xlu0 %1114, %v1001
        %v1116 = vpop.permute.xlu0 %1115
        %1119 = vset.pattern.permute.xlu0 0
        %1120 = vperm.xlu0 %1119, %v1002
        %v1121 = vpop.permute.xlu0 %1120
        %v1147 = vunpack.c.l.b16 %v955
        %v1148 = vunpack.c.l.b16 %v956
        %v1149 = vunpack.c.l.b16 %v957
        %v1150 = vunpack.c.l.b16 %v958
        %v1151 = vunpack.c.l.b16 %v959
        %v1152 = vunpack.c.l.b16 %v960
        %v1153 = vunpack.c.l.b16 %v961
        %v1154 = vunpack.c.l.b16 %v962
        %v1155 = vunpack.c.l.b16 %v963
        %v1156 = vunpack.c.l.b16 %v964
        %v1157 = vunpack.c.l.b16 %v965
        %v1158 = vunpack.c.l.b16 %v966
        %v1159 = vunpack.c.l.b16 %v967
        %v1160 = vunpack.c.l.b16 %v968
        %v1161 = vunpack.c.l.b16 %v969
        %v1162 = vunpack.c.l.b16 %v970
        %v1163 = vunpack.c.l.b16 %v971
        %v1164 = vunpack.c.l.b16 %v972
        %v1165 = vunpack.c.l.b16 %v973
        %v1166 = vunpack.c.l.b16 %v974
        %v1167 = vunpack.c.l.b16 %v975
        %v1168 = vunpack.c.l.b16 %v976
        %v1169 = vunpack.c.l.b16 %v977
        %v1170 = vunpack.c.l.b16 %v978
        %v1171 = vpack.c.b16 %v1148, %v1147
        %v1172 = vpack.c.b16 %v1150, %v1149
        %v1173 = vpack.c.b16 %v1152, %v1151
        %v1174 = vpack.c.b16 %v1154, %v1153
        %v1175 = vpack.c.b16 %v1156, %v1155
        %v1176 = vpack.c.b16 %v1158, %v1157
        %v1177 = vpack.c.b16 %v1160, %v1159
        %v1178 = vpack.c.b16 %v1162, %v1161
        %v1179 = vpack.c.b16 %v1164, %v1163
        %v1180 = vpack.c.b16 %v1166, %v1165
        %v1181 = vpack.c.b16 %v1168, %v1167
        %v1182 = vpack.c.b16 %v1170, %v1169
        %v1184 = vsel %vm389, %v1171, 0
        %v1187 = vsel %vm389, %v1172, 0
        %v1190 = vsel %vm389, %v1173, 0
        %v1193 = vsel %vm389, %v1174, 0
        %v1196 = vsel %vm389, %v1175, 0
        %v1199 = vsel %vm389, %v1176, 0
        %v1202 = vsel %vm389, %v1177, 0
        %v1205 = vsel %vm389, %v1178, 0
        %v1208 = vsel %vm389, %v1179, 0
        %v1211 = vsel %vm389, %v1180, 0
        %v1214 = vsel %vm389, %v1181, 0
        %v1217 = vsel %vm389, %v1182, 0
        %1219 = vmatprep.subr.bf16.mxu0 0
        %1220 = vmatpush1.bf16.msra.mxu0 0
        %1221 = vmatprep.subr.bf16.mxu0 0
        %1222 = vmatpush1.bf16.msra.mxu0 0
        %1223 = vmatprep.subr.bf16.mxu0 0
        %1224 = vmatpush1.bf16.msra.mxu0 0
        %1225 = vmatprep.subr.bf16.mxu0 0
        %1226 = vmatpush1.bf16.msra.mxu0 0
        %1227 = vmatprep.subr.bf16.mxu0 %v954
        %1228 = vmatpush1.bf16.msra.mxu0 %v953
        %1229 = vmatprep.subr.bf16.mxu0 %v952
        %1230 = vmatpush1.bf16.msra.mxu0 %v951
        %1231 = vmatprep.subr.bf16.mxu0 %v950
        %1232 = vmatpush1.bf16.msra.mxu0 %v949
        %1233 = vmatprep.subr.bf16.mxu0 %v948
        %1234 = vmatpush1.bf16.msra.mxu0 %v947
        %1235 = vmatprep.subr.bf16.mxu0 0
        %1236 = vmatpush2.bf16.msra.mxu0 0
        %1237 = vmatprep.subr.bf16.mxu0 0
        %1238 = vmatpush2.bf16.msra.mxu0 0
        %1239 = vmatprep.subr.bf16.mxu0 0
        %1240 = vmatpush2.bf16.msra.mxu0 0
        %1241 = vmatprep.subr.bf16.mxu0 0
        %1242 = vmatpush2.bf16.msra.mxu0 0
        %1243 = vmatprep.subr.bf16.mxu0 0
        %1244 = vmatpush2.bf16.msra.mxu0 0
        %1245 = vmatprep.subr.bf16.mxu0 0
        %1246 = vmatpush2.bf16.msra.mxu0 0
        %1247 = vmatprep.subr.bf16.mxu0 0
        %1248 = vmatpush2.bf16.msra.mxu0 0
        %1249 = vmatprep.subr.bf16.mxu0 0
        %1250 = vmatpush2.bf16.msra.mxu0 0
        %1251 = vmatprep.mubr.bf16.mxu0 0
        %1252 = vmatmul.mubr.bf16.gmra.mxu0 %v1184
        %v1253 = vpop.f32.mrf.mxu0
        %v1254 = vadd.f32 %v1006, %v1253
        %v1255 = vpop.f32.mrf.mxu0
        %v1256 = vadd.f32 %v1006, %v1255
        %v1257 = vpop.f32.mrf.mxu0
        %v1258 = vadd.f32 %v1011, %v1257
        %v1259 = vpop.f32.mrf.mxu0
        %v1260 = vadd.f32 %v1011, %v1259
        %1261 = vmatprep.mubr.bf16.mxu0 0
        %1262 = vmatmul.mubr.bf16.gmra.mxu0 %v1187
        %v1263 = vpop.f32.mrf.mxu0
        %v1264 = vadd.f32 %v1016, %v1263
        %v1265 = vpop.f32.mrf.mxu0
        %v1266 = vadd.f32 %v1016, %v1265
        %v1267 = vpop.f32.mrf.mxu0
        %v1268 = vadd.f32 %v1021, %v1267
        %v1269 = vpop.f32.mrf.mxu0
        %v1270 = vadd.f32 %v1021, %v1269
        %1271 = vmatprep.mubr.bf16.mxu0 0
        %1272 = vmatmul.mubr.bf16.gmra.mxu0 %v1190
        %v1273 = vpop.f32.mrf.mxu0
        %v1274 = vadd.f32 %v1026, %v1273
        %v1275 = vpop.f32.mrf.mxu0
        %v1276 = vadd.f32 %v1026, %v1275
        %v1277 = vpop.f32.mrf.mxu0
        %v1278 = vadd.f32 %v1031, %v1277
        %v1279 = vpop.f32.mrf.mxu0
        %v1280 = vadd.f32 %v1031, %v1279
        %1281 = vmatprep.mubr.bf16.mxu0 0
        %1282 = vmatmul.mubr.bf16.gmra.mxu0 %v1193
        %v1283 = vpop.f32.mrf.mxu0
        %v1284 = vadd.f32 %v1036, %v1283
        %v1285 = vpop.f32.mrf.mxu0
        %v1286 = vadd.f32 %v1036, %v1285
        %v1287 = vpop.f32.mrf.mxu0
        %v1288 = vadd.f32 %v1041, %v1287
        %v1289 = vpop.f32.mrf.mxu0
        %v1290 = vadd.f32 %v1041, %v1289
        %1291 = vmatprep.mubr.bf16.mxu0 0
        %1292 = vmatmul.mubr.bf16.gmra.mxu0 %v1196
        %v1293 = vpop.f32.mrf.mxu0
        %v1294 = vadd.f32 %v1046, %v1293
        %v1295 = vpop.f32.mrf.mxu0
        %v1296 = vadd.f32 %v1046, %v1295
        %v1297 = vpop.f32.mrf.mxu0
        %v1298 = vadd.f32 %v1051, %v1297
        %v1299 = vpop.f32.mrf.mxu0
        %v1300 = vadd.f32 %v1051, %v1299
        %1301 = vmatprep.mubr.bf16.mxu0 0
        %1302 = vmatmul.mubr.bf16.gmra.mxu0 %v1199
        %v1303 = vpop.f32.mrf.mxu0
        %v1304 = vadd.f32 %v1056, %v1303
        %v1305 = vpop.f32.mrf.mxu0
        %v1306 = vadd.f32 %v1056, %v1305
        %v1307 = vpop.f32.mrf.mxu0
        %v1308 = vadd.f32 %v1061, %v1307
        %v1309 = vpop.f32.mrf.mxu0
        %v1310 = vadd.f32 %v1061, %v1309
        %1311 = vmatprep.mubr.bf16.mxu0 0
        %1312 = vmatmul.mubr.bf16.gmra.mxu0 %v1202
        %v1313 = vpop.f32.mrf.mxu0
        %v1314 = vadd.f32 %v1066, %v1313
        %v1315 = vpop.f32.mrf.mxu0
        %v1316 = vadd.f32 %v1066, %v1315
        %v1317 = vpop.f32.mrf.mxu0
        %v1318 = vadd.f32 %v1071, %v1317
        %v1319 = vpop.f32.mrf.mxu0
        %v1320 = vadd.f32 %v1071, %v1319
        %1321 = vmatprep.mubr.bf16.mxu0 0
        %1322 = vmatmul.mubr.bf16.gmra.mxu0 %v1205
        %v1323 = vpop.f32.mrf.mxu0
        %v1324 = vadd.f32 %v1076, %v1323
        %v1325 = vpop.f32.mrf.mxu0
        %v1326 = vadd.f32 %v1076, %v1325
        %v1327 = vpop.f32.mrf.mxu0
        %v1328 = vadd.f32 %v1081, %v1327
        %v1329 = vpop.f32.mrf.mxu0
        %v1330 = vadd.f32 %v1081, %v1329
        %1331 = vmatprep.mubr.bf16.mxu0 0
        %1332 = vmatmul.mubr.bf16.gmra.mxu0 %v1208
        %v1333 = vpop.f32.mrf.mxu0
        %v1334 = vadd.f32 %v1086, %v1333
        %v1335 = vpop.f32.mrf.mxu0
        %v1336 = vadd.f32 %v1086, %v1335
        %v1337 = vpop.f32.mrf.mxu0
        %v1338 = vadd.f32 %v1091, %v1337
        %v1339 = vpop.f32.mrf.mxu0
        %v1340 = vadd.f32 %v1091, %v1339
        %1341 = vmatprep.mubr.bf16.mxu0 0
        %1342 = vmatmul.mubr.bf16.gmra.mxu0 %v1211
        %v1343 = vpop.f32.mrf.mxu0
        %v1344 = vadd.f32 %v1096, %v1343
        %v1345 = vpop.f32.mrf.mxu0
        %v1346 = vadd.f32 %v1096, %v1345
        %v1347 = vpop.f32.mrf.mxu0
        %v1348 = vadd.f32 %v1101, %v1347
        %v1349 = vpop.f32.mrf.mxu0
        %v1350 = vadd.f32 %v1101, %v1349
        %1351 = vmatprep.mubr.bf16.mxu0 0
        %1352 = vmatmul.mubr.bf16.gmra.mxu0 %v1214
        %v1353 = vpop.f32.mrf.mxu0
        %v1354 = vadd.f32 %v1106, %v1353
        %v1355 = vpop.f32.mrf.mxu0
        %v1356 = vadd.f32 %v1106, %v1355
        %v1357 = vpop.f32.mrf.mxu0
        %v1358 = vadd.f32 %v1111, %v1357
        %v1359 = vpop.f32.mrf.mxu0
        %v1360 = vadd.f32 %v1111, %v1359
        %1361 = vmatprep.mubr.bf16.mxu0 0
        %1362 = vmatmul.mubr.bf16.gmra.mxu0 %v1217
        %v1363 = vpop.f32.mrf.mxu0
        %v1364 = vadd.f32 %v1116, %v1363
        %v1365 = vpop.f32.mrf.mxu0
        %v1366 = vadd.f32 %v1116, %v1365
        %v1367 = vpop.f32.mrf.mxu0
        %v1368 = vadd.f32 %v1121, %v1367
        %v1369 = vpop.f32.mrf.mxu0
        %v1370 = vadd.f32 %v1121, %v1369
        %1371 = vdwg.mxu0
        %v1372 = vpack.c.bf16 %v1258, %v1254
        %v1373 = vpack.c.bf16 %v1260, %v1256
        %v1374 = vpack.c.bf16 %v1268, %v1264
        %v1375 = vpack.c.bf16 %v1270, %v1266
        %v1376 = vpack.c.bf16 %v1278, %v1274
        %v1377 = vpack.c.bf16 %v1280, %v1276
        %v1378 = vpack.c.bf16 %v1288, %v1284
        %v1379 = vpack.c.bf16 %v1290, %v1286
        %v1380 = vpack.c.bf16 %v1298, %v1294
        %v1381 = vpack.c.bf16 %v1300, %v1296
        %v1382 = vpack.c.bf16 %v1308, %v1304
        %v1383 = vpack.c.bf16 %v1310, %v1306
        %v1384 = vpack.c.bf16 %v1318, %v1314
        %v1385 = vpack.c.bf16 %v1320, %v1316
        %v1386 = vpack.c.bf16 %v1328, %v1324
        %v1387 = vpack.c.bf16 %v1330, %v1326
        %v1388 = vpack.c.bf16 %v1338, %v1334
        %v1389 = vpack.c.bf16 %v1340, %v1336
        %v1390 = vpack.c.bf16 %v1348, %v1344
        %v1391 = vpack.c.bf16 %v1350, %v1346
        %v1392 = vpack.c.bf16 %v1358, %v1354
        %v1393 = vpack.c.bf16 %v1360, %v1356
        %v1394 = vpack.c.bf16 %v1368, %v1364
        %v1395 = vpack.c.bf16 %v1370, %v1366
        %v1420 = vunpack.c.l.b16 %v1372
        %v1421 = vunpack.c.l.b16 %v1373
        %v1422 = vunpack.c.h.b16 %v1372
        %v1423 = vunpack.c.h.b16 %v1373
        %v1424 = vunpack.c.l.b16 %v1374
        %v1425 = vunpack.c.l.b16 %v1375
        %v1426 = vunpack.c.h.b16 %v1374
        %v1427 = vunpack.c.h.b16 %v1375
        %v1428 = vunpack.c.l.b16 %v1376
        %v1429 = vunpack.c.l.b16 %v1377
        %v1430 = vunpack.c.h.b16 %v1376
        %v1431 = vunpack.c.h.b16 %v1377
        %v1432 = vunpack.c.l.b16 %v1378
        %v1433 = vunpack.c.l.b16 %v1379
        %v1434 = vunpack.c.h.b16 %v1378
        %v1435 = vunpack.c.h.b16 %v1379
        %v1436 = vunpack.c.l.b16 %v1380
        %v1437 = vunpack.c.l.b16 %v1381
        %v1438 = vunpack.c.h.b16 %v1380
        %v1439 = vunpack.c.h.b16 %v1381
        %v1440 = vunpack.c.l.b16 %v1382
        %v1441 = vunpack.c.l.b16 %v1383
        %v1442 = vunpack.c.h.b16 %v1382
        %v1443 = vunpack.c.h.b16 %v1383
        %v1444 = vunpack.c.l.b16 %v1384
        %v1445 = vunpack.c.l.b16 %v1385
        %v1446 = vunpack.c.h.b16 %v1384
        %v1447 = vunpack.c.h.b16 %v1385
        %v1448 = vunpack.c.l.b16 %v1386
        %v1449 = vunpack.c.l.b16 %v1387
        %v1450 = vunpack.c.h.b16 %v1386
        %v1451 = vunpack.c.h.b16 %v1387
        %v1452 = vunpack.c.l.b16 %v1388
        %v1453 = vunpack.c.l.b16 %v1389
        %v1454 = vunpack.c.h.b16 %v1388
        %v1455 = vunpack.c.h.b16 %v1389
        %v1456 = vunpack.c.l.b16 %v1390
        %v1457 = vunpack.c.l.b16 %v1391
        %v1458 = vunpack.c.h.b16 %v1390
        %v1459 = vunpack.c.h.b16 %v1391
        %v1460 = vunpack.c.l.b16 %v1392
        %v1461 = vunpack.c.l.b16 %v1393
        %v1462 = vunpack.c.h.b16 %v1392
        %v1463 = vunpack.c.h.b16 %v1393
        %v1464 = vunpack.c.l.b16 %v1394
        %v1465 = vunpack.c.l.b16 %v1395
        %v1466 = vunpack.c.h.b16 %v1394
        %v1467 = vunpack.c.h.b16 %v1395
        %v1468 = vpack.c.b16 %v1421, %v1420
        %v1469 = vpack.c.b16 %v1423, %v1422
        %v1470 = vpack.c.b16 %v1425, %v1424
        %v1471 = vpack.c.b16 %v1427, %v1426
        %v1472 = vpack.c.b16 %v1429, %v1428
        %v1473 = vpack.c.b16 %v1431, %v1430
        %v1474 = vpack.c.b16 %v1433, %v1432
        %v1475 = vpack.c.b16 %v1435, %v1434
        %v1476 = vpack.c.b16 %v1437, %v1436
        %v1477 = vpack.c.b16 %v1439, %v1438
        %v1478 = vpack.c.b16 %v1441, %v1440
        %v1479 = vpack.c.b16 %v1443, %v1442
        %v1480 = vpack.c.b16 %v1445, %v1444
        %v1481 = vpack.c.b16 %v1447, %v1446
        %v1482 = vpack.c.b16 %v1449, %v1448
        %v1483 = vpack.c.b16 %v1451, %v1450
        %v1484 = vpack.c.b16 %v1453, %v1452
        %v1485 = vpack.c.b16 %v1455, %v1454
        %v1486 = vpack.c.b16 %v1457, %v1456
        %v1487 = vpack.c.b16 %v1459, %v1458
        %v1488 = vpack.c.b16 %v1461, %v1460
        %v1489 = vpack.c.b16 %v1463, %v1462
        %v1490 = vpack.c.b16 %v1465, %v1464
        %v1491 = vpack.c.b16 %v1467, %v1466
        %1516 = vst [vmem:[#allocation2] sm:$0xff] %v1468
        %1517 = vst [vmem:[#allocation2 + $0x8] sm:$0xff] %v1469
        %1518 = vst [vmem:[#allocation2 + $0x10] sm:$0xff] %v1470
        %1519 = vst [vmem:[#allocation2 + $0x18] sm:$0xff] %v1471
        %1520 = vst [vmem:[#allocation2 + $0x20] sm:$0xff] %v1472
        %1521 = vst [vmem:[#allocation2 + $0x28] sm:$0xff] %v1473
        %1522 = vst [vmem:[#allocation2 + $0x30] sm:$0xff] %v1474
        %1523 = vst [vmem:[#allocation2 + $0x38] sm:$0xff] %v1475
        %1524 = vst [vmem:[#allocation2 + $0x40] sm:$0xff] %v1476
        %1525 = vst [vmem:[#allocation2 + $0x48] sm:$0xff] %v1477
        %1526 = vst [vmem:[#allocation2 + $0x50] sm:$0xff] %v1478
        %1527 = vst [vmem:[#allocation2 + $0x58] sm:$0xff] %v1479
        %1528 = vst [vmem:[#allocation2 + $0x60] sm:$0xff] %v1480
        %1529 = vst [vmem:[#allocation2 + $0x68] sm:$0xff] %v1481
        %1530 = vst [vmem:[#allocation2 + $0x70] sm:$0xff] %v1482
        %1531 = vst [vmem:[#allocation2 + $0x78] sm:$0xff] %v1483
        %1532 = vst [vmem:[#allocation2 + $0x80] sm:$0xff] %v1484
        %1533 = vst [vmem:[#allocation2 + $0x88] sm:$0xff] %v1485
        %1534 = vst [vmem:[#allocation2 + $0x90] sm:$0xff] %v1486
        %1535 = vst [vmem:[#allocation2 + $0x98] sm:$0xff] %v1487
        %1536 = vst [vmem:[#allocation2 + $0xa0] sm:$0xff] %v1488
        %1537 = vst [vmem:[#allocation2 + $0xa8] sm:$0xff] %v1489
        %1538 = vst [vmem:[#allocation2 + $0xb0] sm:$0xff] %v1490
        %1539 = vst [vmem:[#allocation2 + $0xb8] sm:$0xff] %v1491
        loop: start=0, step=1, limit=4
        $region41: #{tpu_custom_call.1} parent=39 // loop_pre_header
          _
        $region42: #{tpu_custom_call.1} parent=39 // loop_header
          %s1541 = sphi 0, %s1545
          %p1542 = scmp.ge.s32.totalorder %s1541, 4
        $region43: #{tpu_custom_call.1} parent=39 // loop_header_branch
          %1544 = sbr.rel (%p1542) target = $region47
        $region44: #{tpu_custom_call.1} parent=39 // loop_body
          %s1546 = smul.u32 %s1541, 48
          %s1547 = sshra.s32 %s1546, 3
          %s1548 = sand.u32 %s1546, 7
          %s1549 = smul.u32 %s1547, 2
          %s1550 = smul.addr %s1549, 4
          %s1551 = scalar_lea.vmem [#allocation2], %s1550
          %v1552 = vld [vmem:[%s1551] sm:$0xff]
          %v1553 = vld [vmem:[%s1551 + $0x8] sm:$0xff]
          %s1554 = sadd.s32 %s1546, 16
          %s1555 = sshra.s32 %s1554, 3
          %s1556 = sand.u32 %s1554, 7
          %s1557 = smul.u32 %s1555, 2
          %s1558 = sadd.s32 0, %s1557
          %s1559 = smul.addr %s1558, 4
          %s1560 = scalar_lea.vmem [#allocation2], %s1559
          %v1561 = vld [vmem:[%s1560] sm:$0xff]
          %v1562 = vld [vmem:[%s1560 + $0x8] sm:$0xff]
          %s1563 = sadd.s32 %s1546, 32
          %s1564 = sshra.s32 %s1563, 3
          %s1565 = sand.u32 %s1563, 7
          %s1566 = smul.u32 %s1564, 2
          %s1567 = sadd.s32 0, %s1566
          %s1568 = smul.addr %s1567, 4
          %s1569 = scalar_lea.vmem [#allocation2], %s1568
          %v1570 = vld [vmem:[%s1569] sm:$0xff]
          %v1571 = vld [vmem:[%s1569 + $0x8] sm:$0xff]
          %v1574 = vunpack.c.l.b16 %v1561
          %v1575 = vunpack.c.h.b16 %v1561
          %v1576 = vunpack.c.l.b16 %v1562
          %v1577 = vunpack.c.h.b16 %v1562
          %v1578 = vpack.c.b16 %v1576, %v1574
          %v1579 = vpack.c.b16 %v1577, %v1575
          %1582 = vxpose.xlu0.c.b16.start [1/8] %v1578, 128
          %1583 = vxpose.xlu0.c.b16.cont [2/8] 0, 128
          %1584 = vxpose.xlu0.c.b16.cont [3/8] 0, 128
          %1585 = vxpose.xlu0.c.b16.cont [4/8] 0, 128
          %1586 = vxpose.xlu0.c.b16.cont [5/8] 0, 128
          %1587 = vxpose.xlu0.c.b16.cont [6/8] 0, 128
          %1588 = vxpose.xlu0.c.b16.cont [7/8] 0, 128
          %1589 = vxpose.xlu0.c.b16.end [8/8] 0, 128
          %v1590 = vpop.trf.xlu0
          %v1591 = vpop.trf.xlu0
          %v1592 = vpop.trf.xlu0
          %v1593 = vpop.trf.xlu0
          %v1594 = vpop.trf.xlu0
          %v1595 = vpop.trf.xlu0
          %v1596 = vpop.trf.xlu0
          %v1597 = vpop.trf.xlu0
          %1598 = vxpose.xlu0.c.b16.start [1/8] %v1579, 128
          %1599 = vxpose.xlu0.c.b16.cont [2/8] 0, 128
          %1600 = vxpose.xlu0.c.b16.cont [3/8] 0, 128
          %1601 = vxpose.xlu0.c.b16.cont [4/8] 0, 128
          %1602 = vxpose.xlu0.c.b16.cont [5/8] 0, 128
          %1603 = vxpose.xlu0.c.b16.cont [6/8] 0, 128
          %1604 = vxpose.xlu0.c.b16.cont [7/8] 0, 128
          %1605 = vxpose.xlu0.c.b16.end [8/8] 0, 128
          %v1606 = vpop.trf.xlu0
          %v1607 = vpop.trf.xlu0
          %v1608 = vpop.trf.xlu0
          %v1609 = vpop.trf.xlu0
          %v1610 = vpop.trf.xlu0
          %v1611 = vpop.trf.xlu0
          %v1612 = vpop.trf.xlu0
          %v1613 = vpop.trf.xlu0
          %v1616 = vunpack.c.l.b16 %v1552
          %v1617 = vunpack.c.h.b16 %v1552
          %v1618 = vunpack.c.l.b16 %v1553
          %v1619 = vunpack.c.h.b16 %v1553
          %v1620 = vpack.c.b16 %v1618, %v1616
          %v1621 = vpack.c.b16 %v1619, %v1617
          %vm1624 = vcmask 130048
          %v1626 = vsel %vm1624, %v1590, 0
          %v1629 = vsel %vm1624, %v1591, 0
          %v1632 = vsel %vm1624, %v1592, 0
          %v1635 = vsel %vm1624, %v1593, 0
          %v1638 = vsel %vm1624, %v1594, 0
          %v1641 = vsel %vm1624, %v1595, 0
          %v1644 = vsel %vm1624, %v1596, 0
          %v1647 = vsel %vm1624, %v1597, 0
          %v1650 = vsel %vm1624, %v1606, 0
          %v1653 = vsel %vm1624, %v1607, 0
          %v1656 = vsel %vm1624, %v1608, 0
          %v1659 = vsel %vm1624, %v1609, 0
          %v1662 = vsel %vm1624, %v1610, 0
          %v1665 = vsel %vm1624, %v1611, 0
          %v1668 = vsel %vm1624, %v1612, 0
          %v1671 = vsel %vm1624, %v1613, 0
          %1673 = vmatprep.subr.bf16.mxu0 0
          %1674 = vmatpush1.bf16.msra.mxu0 0
          %1675 = vmatprep.subr.bf16.mxu0 0
          %1676 = vmatpush1.bf16.msra.mxu0 0
          %1677 = vmatprep.subr.bf16.mxu0 0
          %1678 = vmatpush1.bf16.msra.mxu0 0
          %1679 = vmatprep.subr.bf16.mxu0 0
          %1680 = vmatpush1.bf16.msra.mxu0 0
          %1681 = vmatprep.subr.bf16.mxu0 0
          %1682 = vmatpush1.bf16.msra.mxu0 0
          %1683 = vmatprep.subr.bf16.mxu0 0
          %1684 = vmatpush1.bf16.msra.mxu0 0
          %1685 = vmatprep.subr.bf16.mxu0 0
          %1686 = vmatpush1.bf16.msra.mxu0 0
          %1687 = vmatprep.subr.bf16.mxu0 %v1621
          %1688 = vmatpush1.bf16.msra.mxu0 %v1620
          %1689 = vmatprep.subr.bf16.mxu0 0
          %1690 = vmatpush2.bf16.msra.mxu0 0
          %1691 = vmatprep.subr.bf16.mxu0 0
          %1692 = vmatpush2.bf16.msra.mxu0 0
          %1693 = vmatprep.subr.bf16.mxu0 0
          %1694 = vmatpush2.bf16.msra.mxu0 0
          %1695 = vmatprep.subr.bf16.mxu0 0
          %1696 = vmatpush2.bf16.msra.mxu0 0
          %1697 = vmatprep.subr.bf16.mxu0 0
          %1698 = vmatpush2.bf16.msra.mxu0 0
          %1699 = vmatprep.subr.bf16.mxu0 0
          %1700 = vmatpush2.bf16.msra.mxu0 0
          %1701 = vmatprep.subr.bf16.mxu0 0
          %1702 = vmatpush2.bf16.msra.mxu0 0
          %1703 = vmatprep.subr.bf16.mxu0 0
          %1704 = vmatpush2.bf16.msra.mxu0 0
          %1705 = vmatprep.mubr.bf16.mxu0 0
          %1706 = vmatmul.mubr.bf16.gmra.mxu0 %v1626
          %v1707 = vpop.f32.mrf.mxu0
          %v1708 = vadd.f32 0.0, %v1707
          %v1709 = vpop.f32.mrf.mxu0
          %v1710 = vadd.f32 0.0, %v1709
          %v1711 = vpop.f32.mrf.mxu0
          %v1712 = vadd.f32 0.0, %v1711
          %v1713 = vpop.f32.mrf.mxu0
          %v1714 = vadd.f32 0.0, %v1713
          %1715 = vmatprep.mubr.bf16.mxu0 0
          %1716 = vmatmul.mubr.bf16.gmra.mxu0 %v1629
          %v1717 = vpop.f32.mrf.mxu0
          %v1718 = vadd.f32 0.0, %v1717
          %v1719 = vpop.f32.mrf.mxu0
          %v1720 = vadd.f32 0.0, %v1719
          %v1721 = vpop.f32.mrf.mxu0
          %v1722 = vadd.f32 0.0, %v1721
          %v1723 = vpop.f32.mrf.mxu0
          %v1724 = vadd.f32 0.0, %v1723
          %1725 = vmatprep.mubr.bf16.mxu0 0
          %1726 = vmatmul.mubr.bf16.gmra.mxu0 %v1632
          %v1727 = vpop.f32.mrf.mxu0
          %v1728 = vadd.f32 0.0, %v1727
          %v1729 = vpop.f32.mrf.mxu0
          %v1730 = vadd.f32 0.0, %v1729
          %v1731 = vpop.f32.mrf.mxu0
          %v1732 = vadd.f32 0.0, %v1731
          %v1733 = vpop.f32.mrf.mxu0
          %v1734 = vadd.f32 0.0, %v1733
          %1735 = vmatprep.mubr.bf16.mxu0 0
          %1736 = vmatmul.mubr.bf16.gmra.mxu0 %v1635
          %v1737 = vpop.f32.mrf.mxu0
          %v1738 = vadd.f32 0.0, %v1737
          %v1739 = vpop.f32.mrf.mxu0
          %v1740 = vadd.f32 0.0, %v1739
          %v1741 = vpop.f32.mrf.mxu0
          %v1742 = vadd.f32 0.0, %v1741
          %v1743 = vpop.f32.mrf.mxu0
          %v1744 = vadd.f32 0.0, %v1743
          %1745 = vmatprep.mubr.bf16.mxu0 0
          %1746 = vmatmul.mubr.bf16.gmra.mxu0 %v1638
          %v1747 = vpop.f32.mrf.mxu0
          %v1748 = vadd.f32 0.0, %v1747
          %v1749 = vpop.f32.mrf.mxu0
          %v1750 = vadd.f32 0.0, %v1749
          %v1751 = vpop.f32.mrf.mxu0
          %v1752 = vadd.f32 0.0, %v1751
          %v1753 = vpop.f32.mrf.mxu0
          %v1754 = vadd.f32 0.0, %v1753
          %1755 = vmatprep.mubr.bf16.mxu0 0
          %1756 = vmatmul.mubr.bf16.gmra.mxu0 %v1641
          %v1757 = vpop.f32.mrf.mxu0
          %v1758 = vadd.f32 0.0, %v1757
          %v1759 = vpop.f32.mrf.mxu0
          %v1760 = vadd.f32 0.0, %v1759
          %v1761 = vpop.f32.mrf.mxu0
          %v1762 = vadd.f32 0.0, %v1761
          %v1763 = vpop.f32.mrf.mxu0
          %v1764 = vadd.f32 0.0, %v1763
          %1765 = vmatprep.mubr.bf16.mxu0 0
          %1766 = vmatmul.mubr.bf16.gmra.mxu0 %v1644
          %v1767 = vpop.f32.mrf.mxu0
          %v1768 = vadd.f32 0.0, %v1767
          %v1769 = vpop.f32.mrf.mxu0
          %v1770 = vadd.f32 0.0, %v1769
          %v1771 = vpop.f32.mrf.mxu0
          %v1772 = vadd.f32 0.0, %v1771
          %v1773 = vpop.f32.mrf.mxu0
          %v1774 = vadd.f32 0.0, %v1773
          %1775 = vmatprep.mubr.bf16.mxu0 0
          %1776 = vmatmul.mubr.bf16.gmra.mxu0 %v1647
          %v1777 = vpop.f32.mrf.mxu0
          %v1778 = vadd.f32 0.0, %v1777
          %v1779 = vpop.f32.mrf.mxu0
          %v1780 = vadd.f32 0.0, %v1779
          %v1781 = vpop.f32.mrf.mxu0
          %v1782 = vadd.f32 0.0, %v1781
          %v1783 = vpop.f32.mrf.mxu0
          %v1784 = vadd.f32 0.0, %v1783
          %1785 = vmatprep.mubr.bf16.mxu0 0
          %1786 = vmatmul.mubr.bf16.gmra.mxu0 %v1650
          %v1787 = vpop.f32.mrf.mxu0
          %v1788 = vadd.f32 0.0, %v1787
          %v1789 = vpop.f32.mrf.mxu0
          %v1790 = vadd.f32 0.0, %v1789
          %v1791 = vpop.f32.mrf.mxu0
          %v1792 = vadd.f32 0.0, %v1791
          %v1793 = vpop.f32.mrf.mxu0
          %v1794 = vadd.f32 0.0, %v1793
          %1795 = vmatprep.mubr.bf16.mxu0 0
          %1796 = vmatmul.mubr.bf16.gmra.mxu0 %v1653
          %v1797 = vpop.f32.mrf.mxu0
          %v1798 = vadd.f32 0.0, %v1797
          %v1799 = vpop.f32.mrf.mxu0
          %v1800 = vadd.f32 0.0, %v1799
          %v1801 = vpop.f32.mrf.mxu0
          %v1802 = vadd.f32 0.0, %v1801
          %v1803 = vpop.f32.mrf.mxu0
          %v1804 = vadd.f32 0.0, %v1803
          %1805 = vmatprep.mubr.bf16.mxu0 0
          %1806 = vmatmul.mubr.bf16.gmra.mxu0 %v1656
          %v1807 = vpop.f32.mrf.mxu0
          %v1808 = vadd.f32 0.0, %v1807
          %v1809 = vpop.f32.mrf.mxu0
          %v1810 = vadd.f32 0.0, %v1809
          %v1811 = vpop.f32.mrf.mxu0
          %v1812 = vadd.f32 0.0, %v1811
          %v1813 = vpop.f32.mrf.mxu0
          %v1814 = vadd.f32 0.0, %v1813
          %1815 = vmatprep.mubr.bf16.mxu0 0
          %1816 = vmatmul.mubr.bf16.gmra.mxu0 %v1659
          %v1817 = vpop.f32.mrf.mxu0
          %v1818 = vadd.f32 0.0, %v1817
          %v1819 = vpop.f32.mrf.mxu0
          %v1820 = vadd.f32 0.0, %v1819
          %v1821 = vpop.f32.mrf.mxu0
          %v1822 = vadd.f32 0.0, %v1821
          %v1823 = vpop.f32.mrf.mxu0
          %v1824 = vadd.f32 0.0, %v1823
          %1825 = vmatprep.mubr.bf16.mxu0 0
          %1826 = vmatmul.mubr.bf16.gmra.mxu0 %v1662
          %v1827 = vpop.f32.mrf.mxu0
          %v1828 = vadd.f32 0.0, %v1827
          %v1829 = vpop.f32.mrf.mxu0
          %v1830 = vadd.f32 0.0, %v1829
          %v1831 = vpop.f32.mrf.mxu0
          %v1832 = vadd.f32 0.0, %v1831
          %v1833 = vpop.f32.mrf.mxu0
          %v1834 = vadd.f32 0.0, %v1833
          %1835 = vmatprep.mubr.bf16.mxu0 0
          %1836 = vmatmul.mubr.bf16.gmra.mxu0 %v1665
          %v1837 = vpop.f32.mrf.mxu0
          %v1838 = vadd.f32 0.0, %v1837
          %v1839 = vpop.f32.mrf.mxu0
          %v1840 = vadd.f32 0.0, %v1839
          %v1841 = vpop.f32.mrf.mxu0
          %v1842 = vadd.f32 0.0, %v1841
          %v1843 = vpop.f32.mrf.mxu0
          %v1844 = vadd.f32 0.0, %v1843
          %1845 = vmatprep.mubr.bf16.mxu0 0
          %1846 = vmatmul.mubr.bf16.gmra.mxu0 %v1668
          %v1847 = vpop.f32.mrf.mxu0
          %v1848 = vadd.f32 0.0, %v1847
          %v1849 = vpop.f32.mrf.mxu0
          %v1850 = vadd.f32 0.0, %v1849
          %v1851 = vpop.f32.mrf.mxu0
          %v1852 = vadd.f32 0.0, %v1851
          %v1853 = vpop.f32.mrf.mxu0
          %v1854 = vadd.f32 0.0, %v1853
          %1855 = vmatprep.mubr.bf16.mxu0 0
          %1856 = vmatmul.mubr.bf16.gmra.mxu0 %v1671
          %v1857 = vpop.f32.mrf.mxu0
          %v1858 = vadd.f32 0.0, %v1857
          %v1859 = vpop.f32.mrf.mxu0
          %v1860 = vadd.f32 0.0, %v1859
          %v1861 = vpop.f32.mrf.mxu0
          %v1862 = vadd.f32 0.0, %v1861
          %v1863 = vpop.f32.mrf.mxu0
          %v1864 = vadd.f32 0.0, %v1863
          %1865 = vdwg.mxu0
          %v1866 = vmax.f32 %v1708, %v1718
          %v1867 = vmax.f32 %v1712, %v1722
          %v1868 = vmax.f32 %v1866, %v1728
          %v1869 = vmax.f32 %v1867, %v1732
          %v1870 = vmax.f32 %v1868, %v1738
          %v1871 = vmax.f32 %v1869, %v1742
          %v1872 = vmax.f32 %v1870, %v1748
          %v1873 = vmax.f32 %v1871, %v1752
          %v1874 = vmax.f32 %v1872, %v1758
          %v1875 = vmax.f32 %v1873, %v1762
          %v1876 = vmax.f32 %v1874, %v1768
          %v1877 = vmax.f32 %v1875, %v1772
          %v1878 = vmax.f32 %v1876, %v1778
          %v1879 = vmax.f32 %v1877, %v1782
          %v1880 = vmax.f32 %v1878, %v1788
          %v1881 = vmax.f32 %v1879, %v1792
          %v1882 = vmax.f32 %v1880, %v1798
          %v1883 = vmax.f32 %v1881, %v1802
          %v1884 = vmax.f32 %v1882, %v1808
          %v1885 = vmax.f32 %v1883, %v1812
          %v1886 = vmax.f32 %v1884, %v1818
          %v1887 = vmax.f32 %v1885, %v1822
          %v1888 = vmax.f32 %v1886, %v1828
          %v1889 = vmax.f32 %v1887, %v1832
          %v1890 = vmax.f32 %v1888, %v1838
          %v1891 = vmax.f32 %v1889, %v1842
          %v1892 = vmax.f32 %v1890, %v1848
          %v1893 = vmax.f32 %v1891, %v1852
          %v1894 = vmax.f32 %v1892, %v1858
          %v1895 = vmax.f32 %v1893, %v1862
          %v1896 = vmax.f32 %v1894, %v1895
          %v1897 = vrot.slane %v1896, 4
          %v1898 = vmax.f32 %v1896, %v1897
          %v1899 = vrot.slane %v1898, 2
          %v1900 = vmax.f32 %v1898, %v1899
          %v1901 = vrot.slane %v1900, 1
          %v1902 = vmax.f32 %v1900, %v1901
          %v1903 = vmax.f32 %v1710, %v1720
          %v1904 = vmax.f32 %v1714, %v1724
          %v1905 = vmax.f32 %v1903, %v1730
          %v1906 = vmax.f32 %v1904, %v1734
          %v1907 = vmax.f32 %v1905, %v1740
          %v1908 = vmax.f32 %v1906, %v1744
          %v1909 = vmax.f32 %v1907, %v1750
          %v1910 = vmax.f32 %v1908, %v1754
          %v1911 = vmax.f32 %v1909, %v1760
          %v1912 = vmax.f32 %v1910, %v1764
          %v1913 = vmax.f32 %v1911, %v1770
          %v1914 = vmax.f32 %v1912, %v1774
          %v1915 = vmax.f32 %v1913, %v1780
          %v1916 = vmax.f32 %v1914, %v1784
          %v1917 = vmax.f32 %v1915, %v1790
          %v1918 = vmax.f32 %v1916, %v1794
          %v1919 = vmax.f32 %v1917, %v1800
          %v1920 = vmax.f32 %v1918, %v1804
          %v1921 = vmax.f32 %v1919, %v1810
          %v1922 = vmax.f32 %v1920, %v1814
          %v1923 = vmax.f32 %v1921, %v1820
          %v1924 = vmax.f32 %v1922, %v1824
          %v1925 = vmax.f32 %v1923, %v1830
          %v1926 = vmax.f32 %v1924, %v1834
          %v1927 = vmax.f32 %v1925, %v1840
          %v1928 = vmax.f32 %v1926, %v1844
          %v1929 = vmax.f32 %v1927, %v1850
          %v1930 = vmax.f32 %v1928, %v1854
          %v1931 = vmax.f32 %v1929, %v1860
          %v1932 = vmax.f32 %v1930, %v1864
          %v1933 = vmax.f32 %v1931, %v1932
          %v1934 = vrot.slane %v1933, 4
          %v1935 = vmax.f32 %v1933, %v1934
          %v1936 = vrot.slane %v1935, 2
          %v1937 = vmax.f32 %v1935, %v1936
          %v1938 = vrot.slane %v1937, 1
          %v1939 = vmax.f32 %v1937, %v1938
          %v1940 = vmax.f32 %v1902, -1e+30
          %v1941 = vmax.f32 %v1939, -1e+30
          %v1942 = vsub.f32 -1e+30, %v1940
          %v1943 = vsub.f32 -1e+30, %v1941
          %v1944 = vmul.f32 %v1942, 1.442695
          %v1945 = vpow.pop %v1944
          %v1946 = vmul.f32 %v1943, 1.442695
          %v1947 = vpow.pop %v1946
          %v1948 = vsub.f32 %v1708, %v1940
          %v1949 = vsub.f32 %v1710, %v1941
          %v1950 = vsub.f32 %v1712, %v1940
          %v1951 = vsub.f32 %v1714, %v1941
          %v1952 = vsub.f32 %v1718, %v1940
          %v1953 = vsub.f32 %v1720, %v1941
          %v1954 = vsub.f32 %v1722, %v1940
          %v1955 = vsub.f32 %v1724, %v1941
          %v1956 = vsub.f32 %v1728, %v1940
          %v1957 = vsub.f32 %v1730, %v1941
          %v1958 = vsub.f32 %v1732, %v1940
          %v1959 = vsub.f32 %v1734, %v1941
          %v1960 = vsub.f32 %v1738, %v1940
          %v1961 = vsub.f32 %v1740, %v1941
          %v1962 = vsub.f32 %v1742, %v1940
          %v1963 = vsub.f32 %v1744, %v1941
          %v1964 = vsub.f32 %v1748, %v1940
          %v1965 = vsub.f32 %v1750, %v1941
          %v1966 = vsub.f32 %v1752, %v1940
          %v1967 = vsub.f32 %v1754, %v1941
          %v1968 = vsub.f32 %v1758, %v1940
          %v1969 = vsub.f32 %v1760, %v1941
          %v1970 = vsub.f32 %v1762, %v1940
          %v1971 = vsub.f32 %v1764, %v1941
          %v1972 = vsub.f32 %v1768, %v1940
          %v1973 = vsub.f32 %v1770, %v1941
          %v1974 = vsub.f32 %v1772, %v1940
          %v1975 = vsub.f32 %v1774, %v1941
          %v1976 = vsub.f32 %v1778, %v1940
          %v1977 = vsub.f32 %v1780, %v1941
          %v1978 = vsub.f32 %v1782, %v1940
          %v1979 = vsub.f32 %v1784, %v1941
          %v1980 = vsub.f32 %v1788, %v1940
          %v1981 = vsub.f32 %v1790, %v1941
          %v1982 = vsub.f32 %v1792, %v1940
          %v1983 = vsub.f32 %v1794, %v1941
          %v1984 = vsub.f32 %v1798, %v1940
          %v1985 = vsub.f32 %v1800, %v1941
          %v1986 = vsub.f32 %v1802, %v1940
          %v1987 = vsub.f32 %v1804, %v1941
          %v1988 = vsub.f32 %v1808, %v1940
          %v1989 = vsub.f32 %v1810, %v1941
          %v1990 = vsub.f32 %v1812, %v1940
          %v1991 = vsub.f32 %v1814, %v1941
          %v1992 = vsub.f32 %v1818, %v1940
          %v1993 = vsub.f32 %v1820, %v1941
          %v1994 = vsub.f32 %v1822, %v1940
          %v1995 = vsub.f32 %v1824, %v1941
          %v1996 = vsub.f32 %v1828, %v1940
          %v1997 = vsub.f32 %v1830, %v1941
          %v1998 = vsub.f32 %v1832, %v1940
          %v1999 = vsub.f32 %v1834, %v1941
          %v2000 = vsub.f32 %v1838, %v1940
          %v2001 = vsub.f32 %v1840, %v1941
          %v2002 = vsub.f32 %v1842, %v1940
          %v2003 = vsub.f32 %v1844, %v1941
          %v2004 = vsub.f32 %v1848, %v1940
          %v2005 = vsub.f32 %v1850, %v1941
          %v2006 = vsub.f32 %v1852, %v1940
          %v2007 = vsub.f32 %v1854, %v1941
          %v2008 = vsub.f32 %v1858, %v1940
          %v2009 = vsub.f32 %v1860, %v1941
          %v2010 = vsub.f32 %v1862, %v1940
          %v2011 = vsub.f32 %v1864, %v1941
          %v2012 = vmul.f32 %v1948, 1.442695
          %v2013 = vpow.pop %v2012
          %v2014 = vmul.f32 %v1949, 1.442695
          %v2015 = vpow.pop %v2014
          %v2016 = vmul.f32 %v1950, 1.442695
          %v2017 = vpow.pop %v2016
          %v2018 = vmul.f32 %v1951, 1.442695
          %v2019 = vpow.pop %v2018
          %v2020 = vmul.f32 %v1952, 1.442695
          %v2021 = vpow.pop %v2020
          %v2022 = vmul.f32 %v1953, 1.442695
          %v2023 = vpow.pop %v2022
          %v2024 = vmul.f32 %v1954, 1.442695
          %v2025 = vpow.pop %v2024
          %v2026 = vmul.f32 %v1955, 1.442695
          %v2027 = vpow.pop %v2026
          %v2028 = vmul.f32 %v1956, 1.442695
          %v2029 = vpow.pop %v2028
          %v2030 = vmul.f32 %v1957, 1.442695
          %v2031 = vpow.pop %v2030
          %v2032 = vmul.f32 %v1958, 1.442695
          %v2033 = vpow.pop %v2032
          %v2034 = vmul.f32 %v1959, 1.442695
          %v2035 = vpow.pop %v2034
          %v2036 = vmul.f32 %v1960, 1.442695
          %v2037 = vpow.pop %v2036
          %v2038 = vmul.f32 %v1961, 1.442695
          %v2039 = vpow.pop %v2038
          %v2040 = vmul.f32 %v1962, 1.442695
          %v2041 = vpow.pop %v2040
          %v2042 = vmul.f32 %v1963, 1.442695
          %v2043 = vpow.pop %v2042
          %v2044 = vmul.f32 %v1964, 1.442695
          %v2045 = vpow.pop %v2044
          %v2046 = vmul.f32 %v1965, 1.442695
          %v2047 = vpow.pop %v2046
          %v2048 = vmul.f32 %v1966, 1.442695
          %v2049 = vpow.pop %v2048
          %v2050 = vmul.f32 %v1967, 1.442695
          %v2051 = vpow.pop %v2050
          %v2052 = vmul.f32 %v1968, 1.442695
          %v2053 = vpow.pop %v2052
          %v2054 = vmul.f32 %v1969, 1.442695
          %v2055 = vpow.pop %v2054
          %v2056 = vmul.f32 %v1970, 1.442695
          %v2057 = vpow.pop %v2056
          %v2058 = vmul.f32 %v1971, 1.442695
          %v2059 = vpow.pop %v2058
          %v2060 = vmul.f32 %v1972, 1.442695
          %v2061 = vpow.pop %v2060
          %v2062 = vmul.f32 %v1973, 1.442695
          %v2063 = vpow.pop %v2062
          %v2064 = vmul.f32 %v1974, 1.442695
          %v2065 = vpow.pop %v2064
          %v2066 = vmul.f32 %v1975, 1.442695
          %v2067 = vpow.pop %v2066
          %v2068 = vmul.f32 %v1976, 1.442695
          %v2069 = vpow.pop %v2068
          %v2070 = vmul.f32 %v1977, 1.442695
          %v2071 = vpow.pop %v2070
          %v2072 = vmul.f32 %v1978, 1.442695
          %v2073 = vpow.pop %v2072
          %v2074 = vmul.f32 %v1979, 1.442695
          %v2075 = vpow.pop %v2074
          %v2076 = vmul.f32 %v1980, 1.442695
          %v2077 = vpow.pop %v2076
          %v2078 = vmul.f32 %v1981, 1.442695
          %v2079 = vpow.pop %v2078
          %v2080 = vmul.f32 %v1982, 1.442695
          %v2081 = vpow.pop %v2080
          %v2082 = vmul.f32 %v1983, 1.442695
          %v2083 = vpow.pop %v2082
          %v2084 = vmul.f32 %v1984, 1.442695
          %v2085 = vpow.pop %v2084
          %v2086 = vmul.f32 %v1985, 1.442695
          %v2087 = vpow.pop %v2086
          %v2088 = vmul.f32 %v1986, 1.442695
          %v2089 = vpow.pop %v2088
          %v2090 = vmul.f32 %v1987, 1.442695
          %v2091 = vpow.pop %v2090
          %v2092 = vmul.f32 %v1988, 1.442695
          %v2093 = vpow.pop %v2092
          %v2094 = vmul.f32 %v1989, 1.442695
          %v2095 = vpow.pop %v2094
          %v2096 = vmul.f32 %v1990, 1.442695
          %v2097 = vpow.pop %v2096
          %v2098 = vmul.f32 %v1991, 1.442695
          %v2099 = vpow.pop %v2098
          %v2100 = vmul.f32 %v1992, 1.442695
          %v2101 = vpow.pop %v2100
          %v2102 = vmul.f32 %v1993, 1.442695
          %v2103 = vpow.pop %v2102
          %v2104 = vmul.f32 %v1994, 1.442695
          %v2105 = vpow.pop %v2104
          %v2106 = vmul.f32 %v1995, 1.442695
          %v2107 = vpow.pop %v2106
          %v2108 = vmul.f32 %v1996, 1.442695
          %v2109 = vpow.pop %v2108
          %v2110 = vmul.f32 %v1997, 1.442695
          %v2111 = vpow.pop %v2110
          %v2112 = vmul.f32 %v1998, 1.442695
          %v2113 = vpow.pop %v2112
          %v2114 = vmul.f32 %v1999, 1.442695
          %v2115 = vpow.pop %v2114
          %v2116 = vmul.f32 %v2000, 1.442695
          %v2117 = vpow.pop %v2116
          %v2118 = vmul.f32 %v2001, 1.442695
          %v2119 = vpow.pop %v2118
          %v2120 = vmul.f32 %v2002, 1.442695
          %v2121 = vpow.pop %v2120
          %v2122 = vmul.f32 %v2003, 1.442695
          %v2123 = vpow.pop %v2122
          %v2124 = vmul.f32 %v2004, 1.442695
          %v2125 = vpow.pop %v2124
          %v2126 = vmul.f32 %v2005, 1.442695
          %v2127 = vpow.pop %v2126
          %v2128 = vmul.f32 %v2006, 1.442695
          %v2129 = vpow.pop %v2128
          %v2130 = vmul.f32 %v2007, 1.442695
          %v2131 = vpow.pop %v2130
          %v2132 = vmul.f32 %v2008, 1.442695
          %v2133 = vpow.pop %v2132
          %v2134 = vmul.f32 %v2009, 1.442695
          %v2135 = vpow.pop %v2134
          %v2136 = vmul.f32 %v2010, 1.442695
          %v2137 = vpow.pop %v2136
          %v2138 = vmul.f32 %v2011, 1.442695
          %v2139 = vpow.pop %v2138
          %v2140 = vmul.f32 %v1945, 0.0
          %v2141 = vmul.f32 %v1947, 0.0
          %v2142 = vadd.f32 %v2013, %v2017
          %v2143 = vadd.f32 %v2142, %v2021
          %v2144 = vadd.f32 %v2143, %v2025
          %v2145 = vadd.f32 %v2144, %v2029
          %v2146 = vadd.f32 %v2145, %v2033
          %v2147 = vadd.f32 %v2146, %v2037
          %v2148 = vadd.f32 %v2147, %v2041
          %v2149 = vadd.f32 %v2148, %v2045
          %v2150 = vadd.f32 %v2149, %v2049
          %v2151 = vadd.f32 %v2150, %v2053
          %v2152 = vadd.f32 %v2151, %v2057
          %v2153 = vadd.f32 %v2152, %v2061
          %v2154 = vadd.f32 %v2153, %v2065
          %v2155 = vadd.f32 %v2154, %v2069
          %v2156 = vadd.f32 %v2155, %v2073
          %v2157 = vadd.f32 %v2156, %v2077
          %v2158 = vadd.f32 %v2157, %v2081
          %v2159 = vadd.f32 %v2158, %v2085
          %v2160 = vadd.f32 %v2159, %v2089
          %v2161 = vadd.f32 %v2160, %v2093
          %v2162 = vadd.f32 %v2161, %v2097
          %v2163 = vadd.f32 %v2162, %v2101
          %v2164 = vadd.f32 %v2163, %v2105
          %v2165 = vadd.f32 %v2164, %v2109
          %v2166 = vadd.f32 %v2165, %v2113
          %v2167 = vadd.f32 %v2166, %v2117
          %v2168 = vadd.f32 %v2167, %v2121
          %v2169 = vadd.f32 %v2168, %v2125
          %v2170 = vadd.f32 %v2169, %v2129
          %v2171 = vadd.f32 %v2170, %v2133
          %v2172 = vadd.f32 %v2171, %v2137
          %v2173 = vrot.slane %v2172, 4
          %v2174 = vadd.f32 %v2172, %v2173
          %v2175 = vrot.slane %v2174, 2
          %v2176 = vadd.f32 %v2174, %v2175
          %v2177 = vrot.slane %v2176, 1
          %v2178 = vadd.f32 %v2176, %v2177
          %v2179 = vadd.f32 %v2015, %v2019
          %v2180 = vadd.f32 %v2179, %v2023
          %v2181 = vadd.f32 %v2180, %v2027
          %v2182 = vadd.f32 %v2181, %v2031
          %v2183 = vadd.f32 %v2182, %v2035
          %v2184 = vadd.f32 %v2183, %v2039
          %v2185 = vadd.f32 %v2184, %v2043
          %v2186 = vadd.f32 %v2185, %v2047
          %v2187 = vadd.f32 %v2186, %v2051
          %v2188 = vadd.f32 %v2187, %v2055
          %v2189 = vadd.f32 %v2188, %v2059
          %v2190 = vadd.f32 %v2189, %v2063
          %v2191 = vadd.f32 %v2190, %v2067
          %v2192 = vadd.f32 %v2191, %v2071
          %v2193 = vadd.f32 %v2192, %v2075
          %v2194 = vadd.f32 %v2193, %v2079
          %v2195 = vadd.f32 %v2194, %v2083
          %v2196 = vadd.f32 %v2195, %v2087
          %v2197 = vadd.f32 %v2196, %v2091
          %v2198 = vadd.f32 %v2197, %v2095
          %v2199 = vadd.f32 %v2198, %v2099
          %v2200 = vadd.f32 %v2199, %v2103
          %v2201 = vadd.f32 %v2200, %v2107
          %v2202 = vadd.f32 %v2201, %v2111
          %v2203 = vadd.f32 %v2202, %v2115
          %v2204 = vadd.f32 %v2203, %v2119
          %v2205 = vadd.f32 %v2204, %v2123
          %v2206 = vadd.f32 %v2205, %v2127
          %v2207 = vadd.f32 %v2206, %v2131
          %v2208 = vadd.f32 %v2207, %v2135
          %v2209 = vadd.f32 %v2208, %v2139
          %v2210 = vrot.slane %v2209, 4
          %v2211 = vadd.f32 %v2209, %v2210
          %v2212 = vrot.slane %v2211, 2
          %v2213 = vadd.f32 %v2211, %v2212
          %v2214 = vrot.slane %v2213, 1
          %v2215 = vadd.f32 %v2213, %v2214
          %v2216 = vadd.f32 %v2140, %v2178
          %v2217 = vadd.f32 %v2141, %v2215
          %v2218 = vpack.c.bf16 %v2017, %v2013
          %v2219 = vpack.c.bf16 %v2019, %v2015
          %v2220 = vpack.c.bf16 %v2025, %v2021
          %v2221 = vpack.c.bf16 %v2027, %v2023
          %v2222 = vpack.c.bf16 %v2033, %v2029
          %v2223 = vpack.c.bf16 %v2035, %v2031
          %v2224 = vpack.c.bf16 %v2041, %v2037
          %v2225 = vpack.c.bf16 %v2043, %v2039
          %v2226 = vpack.c.bf16 %v2049, %v2045
          %v2227 = vpack.c.bf16 %v2051, %v2047
          %v2228 = vpack.c.bf16 %v2057, %v2053
          %v2229 = vpack.c.bf16 %v2059, %v2055
          %v2230 = vpack.c.bf16 %v2065, %v2061
          %v2231 = vpack.c.bf16 %v2067, %v2063
          %v2232 = vpack.c.bf16 %v2073, %v2069
          %v2233 = vpack.c.bf16 %v2075, %v2071
          %v2234 = vpack.c.bf16 %v2081, %v2077
          %v2235 = vpack.c.bf16 %v2083, %v2079
          %v2236 = vpack.c.bf16 %v2089, %v2085
          %v2237 = vpack.c.bf16 %v2091, %v2087
          %v2238 = vpack.c.bf16 %v2097, %v2093
          %v2239 = vpack.c.bf16 %v2099, %v2095
          %v2240 = vpack.c.bf16 %v2105, %v2101
          %v2241 = vpack.c.bf16 %v2107, %v2103
          %v2242 = vpack.c.bf16 %v2113, %v2109
          %v2243 = vpack.c.bf16 %v2115, %v2111
          %v2244 = vpack.c.bf16 %v2121, %v2117
          %v2245 = vpack.c.bf16 %v2123, %v2119
          %v2246 = vpack.c.bf16 %v2129, %v2125
          %v2247 = vpack.c.bf16 %v2131, %v2127
          %v2248 = vpack.c.bf16 %v2137, %v2133
          %v2249 = vpack.c.bf16 %v2139, %v2135
          %v2252 = vunpack.c.l.b16 %v1570
          %v2253 = vunpack.c.h.b16 %v1570
          %v2254 = vunpack.c.l.b16 %v1571
          %v2255 = vunpack.c.h.b16 %v1571
          %v2256 = vpack.c.b16 %v2254, %v2252
          %v2257 = vpack.c.b16 %v2255, %v2253
          %2260 = vmatprep.subr.bf16.mxu0 %v2233
          %2261 = vmatpush1.bf16.msra.mxu0 %v2232
          %2262 = vmatprep.subr.bf16.mxu0 %v2231
          %2263 = vmatpush1.bf16.msra.mxu0 %v2230
          %2264 = vmatprep.subr.bf16.mxu0 %v2229
          %2265 = vmatpush1.bf16.msra.mxu0 %v2228
          %2266 = vmatprep.subr.bf16.mxu0 %v2227
          %2267 = vmatpush1.bf16.msra.mxu0 %v2226
          %2268 = vmatprep.subr.bf16.mxu0 %v2225
          %2269 = vmatpush1.bf16.msra.mxu0 %v2224
          %2270 = vmatprep.subr.bf16.mxu0 %v2223
          %2271 = vmatpush1.bf16.msra.mxu0 %v2222
          %2272 = vmatprep.subr.bf16.mxu0 %v2221
          %2273 = vmatpush1.bf16.msra.mxu0 %v2220
          %2274 = vmatprep.subr.bf16.mxu0 %v2219
          %2275 = vmatpush1.bf16.msra.mxu0 %v2218
          %2276 = vmatprep.subr.bf16.mxu0 %v2249
          %2277 = vmatpush2.bf16.msra.mxu0 %v2248
          %2278 = vmatprep.subr.bf16.mxu0 %v2247
          %2279 = vmatpush2.bf16.msra.mxu0 %v2246
          %2280 = vmatprep.subr.bf16.mxu0 %v2245
          %2281 = vmatpush2.bf16.msra.mxu0 %v2244
          %2282 = vmatprep.subr.bf16.mxu0 %v2243
          %2283 = vmatpush2.bf16.msra.mxu0 %v2242
          %2284 = vmatprep.subr.bf16.mxu0 %v2241
          %2285 = vmatpush2.bf16.msra.mxu0 %v2240
          %2286 = vmatprep.subr.bf16.mxu0 %v2239
          %2287 = vmatpush2.bf16.msra.mxu0 %v2238
          %2288 = vmatprep.subr.bf16.mxu0 %v2237
          %2289 = vmatpush2.bf16.msra.mxu0 %v2236
          %2290 = vmatprep.subr.bf16.mxu0 %v2235
          %2291 = vmatpush2.bf16.msra.mxu0 %v2234
          %2292 = vmatprep.mubr.bf16.mxu0 %v2257
          %2293 = vmatmul.mubr.bf16.gmra.mxu0 %v2256
          %v2294 = vpop.f32.mrf.mxu0
          %v2295 = vadd.f32 0.0, %v2294
          %v2296 = vpop.f32.mrf.mxu0
          %v2297 = vadd.f32 0.0, %v2296
          %v2298 = vpop.f32.mrf.mxu0
          %v2299 = vadd.f32 0.0, %v2298
          %v2300 = vpop.f32.mrf.mxu0
          %v2301 = vadd.f32 0.0, %v2300
          %2302 = vdwg.mxu0
          %v2303 = vadd.f32 %v2140, %v2295
          %v2304 = vadd.f32 %v2141, %v2297
          %v2305 = vadd.f32 %v2140, %v2299
          %v2306 = vadd.f32 %v2141, %v2301
          %v2307 = vrcp.pop %v2216
          %v2308 = vrcp.pop %v2217
          %v2309 = vmul.f32 %v2303, %v2307
          %v2310 = vmul.f32 %v2304, %v2308
          %v2311 = vmul.f32 %v2305, %v2307
          %v2312 = vmul.f32 %v2306, %v2308
          %v2313 = vpack.c.bf16 %v2311, %v2309
          %v2314 = vpack.c.bf16 %v2312, %v2310
          %s2315 = smul.u32 %s1541, 16
          %v2318 = vunpack.c.l.b16 %v2313
          %v2319 = vunpack.c.l.b16 %v2314
          %v2320 = vunpack.c.h.b16 %v2313
          %v2321 = vunpack.c.h.b16 %v2314
          %v2322 = vpack.c.b16 %v2319, %v2318
          %v2323 = vpack.c.b16 %v2321, %v2320
          %s2326 = sshra.s32 %s2315, 3
          %s2327 = sand.u32 %s2315, 7
          %s2328 = smul.u32 %s2326, 2
          %s2329 = smul.addr %s2328, 4
          %s2330 = scalar_lea.vmem [#allocation3], %s2329
          %2331 = vst [vmem:[%s2330] sm:$0xff] %v2322
          %2332 = vst [vmem:[%s2330 + $0x8] sm:$0xff] %v2323
        $region45: #{tpu_custom_call.1} parent=39 // loop_footer
          %s1545 = sadd.s32 1, %s1541
        $region46: #{tpu_custom_call.1} parent=39 // loop_footer_branch
          %1540 = sbr.rel target = $region42
        $region47: #{tpu_custom_call.1} parent=39 // loop_exit
          _
        %v2333 = vld [vmem:[%s222] sm:$0xff]
        %v2334 = vld [vmem:[%s222 + $0x8] sm:$0xff]
        %v2335 = vld [vmem:[%s222 + $0x10] sm:$0xff]
        %v2336 = vld [vmem:[%s222 + $0x18] sm:$0xff]
        %v2337 = vld [vmem:[%s222 + $0x20] sm:$0xff]
        %v2338 = vld [vmem:[%s222 + $0x28] sm:$0xff]
        %v2339 = vld [vmem:[%s222 + $0x30] sm:$0xff]
        %v2340 = vld [vmem:[%s222 + $0x38] sm:$0xff]
        %v2341 = vld [vmem:[%s222 + $0x40] sm:$0xff]
        %v2342 = vld [vmem:[%s222 + $0x48] sm:$0xff]
        %v2343 = vld [vmem:[%s222 + $0x50] sm:$0xff]
        %v2344 = vld [vmem:[%s222 + $0x58] sm:$0xff]
        %v2345 = vld [vmem:[%s222 + $0x60] sm:$0xff]
        %v2346 = vld [vmem:[%s222 + $0x68] sm:$0xff]
        %v2347 = vld [vmem:[%s222 + $0x70] sm:$0xff]
        %v2348 = vld [vmem:[%s222 + $0x78] sm:$0xff]
        %v2349 = vld [vmem:[%s4] sm:$0xff]
        %v2350 = vld [vmem:[%s4 + $0x8] sm:$0xff]
        %v2351 = vld [vmem:[%s4 + $0x10] sm:$0xff]
        %v2352 = vld [vmem:[%s4 + $0x18] sm:$0xff]
        %v2353 = vld [vmem:[%s4 + $0x20] sm:$0xff]
        %v2354 = vld [vmem:[%s4 + $0x28] sm:$0xff]
        %v2355 = vld [vmem:[%s4 + $0x30] sm:$0xff]
        %v2356 = vld [vmem:[%s4 + $0x38] sm:$0xff]
        %2358 = vset.pattern.permute.xlu0 0
        %2359 = vperm.xlu0 %2358, %v2349
        %v2360 = vpop.permute.xlu0 %2359
        %2363 = vset.pattern.permute.xlu0 0
        %2364 = vperm.xlu0 %2363, %v2350
        %v2365 = vpop.permute.xlu0 %2364
        %2368 = vset.pattern.permute.xlu0 0
        %2369 = vperm.xlu0 %2368, %v2351
        %v2370 = vpop.permute.xlu0 %2369
        %2373 = vset.pattern.permute.xlu0 0
        %2374 = vperm.xlu0 %2373, %v2352
        %v2375 = vpop.permute.xlu0 %2374
        %2378 = vset.pattern.permute.xlu0 0
        %2379 = vperm.xlu0 %2378, %v2353
        %v2380 = vpop.permute.xlu0 %2379
        %2383 = vset.pattern.permute.xlu0 0
        %2384 = vperm.xlu0 %2383, %v2354
        %v2385 = vpop.permute.xlu0 %2384
        %2388 = vset.pattern.permute.xlu0 0
        %2389 = vperm.xlu0 %2388, %v2355
        %v2390 = vpop.permute.xlu0 %2389
        %2393 = vset.pattern.permute.xlu0 0
        %2394 = vperm.xlu0 %2393, %v2356
        %v2395 = vpop.permute.xlu0 %2394
        %v2397 = vadd.f32 %v2333, %v2360
        %v2398 = vadd.f32 %v2334, %v2360
        %v2399 = vadd.f32 %v2335, %v2365
        %v2400 = vadd.f32 %v2336, %v2365
        %v2401 = vadd.f32 %v2337, %v2370
        %v2402 = vadd.f32 %v2338, %v2370
        %v2403 = vadd.f32 %v2339, %v2375
        %v2404 = vadd.f32 %v2340, %v2375
        %v2405 = vadd.f32 %v2341, %v2380
        %v2406 = vadd.f32 %v2342, %v2380
        %v2407 = vadd.f32 %v2343, %v2385
        %v2408 = vadd.f32 %v2344, %v2385
        %v2409 = vadd.f32 %v2345, %v2390
        %v2410 = vadd.f32 %v2346, %v2390
        %v2411 = vadd.f32 %v2347, %v2395
        %v2412 = vadd.f32 %v2348, %v2395
        %v2413 = vld [vmem:[%s3] sm:$0xf]
        %v2414 = vld [vmem:[%s3 + $0x4] sm:$0xf]
        %v2415 = vld [vmem:[%s3 + $0x8] sm:$0xf]
        %v2416 = vld [vmem:[%s3 + $0xc] sm:$0xf]
        %v2417 = vld [vmem:[%s3 + $0x10] sm:$0xf]
        %v2418 = vld [vmem:[%s3 + $0x14] sm:$0xf]
        %v2419 = vld [vmem:[%s3 + $0x18] sm:$0xf]
        %v2420 = vld [vmem:[%s3 + $0x1c] sm:$0xf]
        %v2421 = vld [vmem:[#allocation3] sm:$0xff]
        %v2422 = vld [vmem:[#allocation3 + $0x8] sm:$0xff]
        %v2423 = vld [vmem:[#allocation3 + $0x10] sm:$0xff]
        %v2424 = vld [vmem:[#allocation3 + $0x18] sm:$0xff]
        %v2425 = vld [vmem:[#allocation3 + $0x20] sm:$0xff]
        %v2426 = vld [vmem:[#allocation3 + $0x28] sm:$0xff]
        %v2427 = vld [vmem:[#allocation3 + $0x30] sm:$0xff]
        %v2428 = vld [vmem:[#allocation3 + $0x38] sm:$0xff]
        %v2437 = vunpack.c.l.b16 %v2413
        %v2438 = vunpack.c.l.b16 %v2414
        %v2439 = vunpack.c.l.b16 %v2415
        %v2440 = vunpack.c.l.b16 %v2416
        %v2441 = vunpack.c.l.b16 %v2417
        %v2442 = vunpack.c.l.b16 %v2418
        %v2443 = vunpack.c.l.b16 %v2419
        %v2444 = vunpack.c.l.b16 %v2420
        %v2445 = vpack.c.b16 %v2438, %v2437
        %v2446 = vpack.c.b16 %v2440, %v2439
        %v2447 = vpack.c.b16 %v2442, %v2441
        %v2448 = vpack.c.b16 %v2444, %v2443
        %v2457 = vunpack.c.l.b16 %v2421
        %v2458 = vunpack.c.h.b16 %v2421
        %v2459 = vunpack.c.l.b16 %v2422
        %v2460 = vunpack.c.h.b16 %v2422
        %v2461 = vunpack.c.l.b16 %v2423
        %v2462 = vunpack.c.h.b16 %v2423
        %v2463 = vunpack.c.l.b16 %v2424
        %v2464 = vunpack.c.h.b16 %v2424
        %v2465 = vunpack.c.l.b16 %v2425
        %v2466 = vunpack.c.h.b16 %v2425
        %v2467 = vunpack.c.l.b16 %v2426
        %v2468 = vunpack.c.h.b16 %v2426
        %v2469 = vunpack.c.l.b16 %v2427
        %v2470 = vunpack.c.h.b16 %v2427
        %v2471 = vunpack.c.l.b16 %v2428
        %v2472 = vunpack.c.h.b16 %v2428
        %v2473 = vpack.c.b16 %v2459, %v2457
        %v2474 = vpack.c.b16 %v2460, %v2458
        %v2475 = vpack.c.b16 %v2463, %v2461
        %v2476 = vpack.c.b16 %v2464, %v2462
        %v2477 = vpack.c.b16 %v2467, %v2465
        %v2478 = vpack.c.b16 %v2468, %v2466
        %v2479 = vpack.c.b16 %v2471, %v2469
        %v2480 = vpack.c.b16 %v2472, %v2470
        %v2490 = vsel %vm389, %v2445, 0
        %v2493 = vsel %vm389, %v2446, 0
        %v2496 = vsel %vm389, %v2447, 0
        %v2499 = vsel %vm389, %v2448, 0
        %2501 = vmatprep.subr.bf16.mxu0 0
        %2502 = vmatpush1.bf16.msra.mxu0 0
        %2503 = vmatprep.subr.bf16.mxu0 0
        %2504 = vmatpush1.bf16.msra.mxu0 0
        %2505 = vmatprep.subr.bf16.mxu0 0
        %2506 = vmatpush1.bf16.msra.mxu0 0
        %2507 = vmatprep.subr.bf16.mxu0 0
        %2508 = vmatpush1.bf16.msra.mxu0 0
        %2509 = vmatprep.subr.bf16.mxu0 %v2480
        %2510 = vmatpush1.bf16.msra.mxu0 %v2479
        %2511 = vmatprep.subr.bf16.mxu0 %v2478
        %2512 = vmatpush1.bf16.msra.mxu0 %v2477
        %2513 = vmatprep.subr.bf16.mxu0 %v2476
        %2514 = vmatpush1.bf16.msra.mxu0 %v2475
        %2515 = vmatprep.subr.bf16.mxu0 %v2474
        %2516 = vmatpush1.bf16.msra.mxu0 %v2473
        %2517 = vmatprep.subr.bf16.mxu0 0
        %2518 = vmatpush2.bf16.msra.mxu0 0
        %2519 = vmatprep.subr.bf16.mxu0 0
        %2520 = vmatpush2.bf16.msra.mxu0 0
        %2521 = vmatprep.subr.bf16.mxu0 0
        %2522 = vmatpush2.bf16.msra.mxu0 0
        %2523 = vmatprep.subr.bf16.mxu0 0
        %2524 = vmatpush2.bf16.msra.mxu0 0
        %2525 = vmatprep.subr.bf16.mxu0 0
        %2526 = vmatpush2.bf16.msra.mxu0 0
        %2527 = vmatprep.subr.bf16.mxu0 0
        %2528 = vmatpush2.bf16.msra.mxu0 0
        %2529 = vmatprep.subr.bf16.mxu0 0
        %2530 = vmatpush2.bf16.msra.mxu0 0
        %2531 = vmatprep.subr.bf16.mxu0 0
        %2532 = vmatpush2.bf16.msra.mxu0 0
        %2533 = vmatprep.mubr.bf16.mxu0 0
        %2534 = vmatmul.mubr.bf16.gmra.mxu0 %v2490
        %v2535 = vpop.f32.mrf.mxu0
        %v2536 = vadd.f32 0.0, %v2535
        %v2537 = vpop.f32.mrf.mxu0
        %v2538 = vadd.f32 0.0, %v2537
        %v2539 = vpop.f32.mrf.mxu0
        %v2540 = vadd.f32 0.0, %v2539
        %v2541 = vpop.f32.mrf.mxu0
        %v2542 = vadd.f32 0.0, %v2541
        %2543 = vmatprep.mubr.bf16.mxu0 0
        %2544 = vmatmul.mubr.bf16.gmra.mxu0 %v2493
        %v2545 = vpop.f32.mrf.mxu0
        %v2546 = vadd.f32 0.0, %v2545
        %v2547 = vpop.f32.mrf.mxu0
        %v2548 = vadd.f32 0.0, %v2547
        %v2549 = vpop.f32.mrf.mxu0
        %v2550 = vadd.f32 0.0, %v2549
        %v2551 = vpop.f32.mrf.mxu0
        %v2552 = vadd.f32 0.0, %v2551
        %2553 = vmatprep.mubr.bf16.mxu0 0
        %2554 = vmatmul.mubr.bf16.gmra.mxu0 %v2496
        %v2555 = vpop.f32.mrf.mxu0
        %v2556 = vadd.f32 0.0, %v2555
        %v2557 = vpop.f32.mrf.mxu0
        %v2558 = vadd.f32 0.0, %v2557
        %v2559 = vpop.f32.mrf.mxu0
        %v2560 = vadd.f32 0.0, %v2559
        %v2561 = vpop.f32.mrf.mxu0
        %v2562 = vadd.f32 0.0, %v2561
        %2563 = vmatprep.mubr.bf16.mxu0 0
        %2564 = vmatmul.mubr.bf16.gmra.mxu0 %v2499
        %v2565 = vpop.f32.mrf.mxu0
        %v2566 = vadd.f32 0.0, %v2565
        %v2567 = vpop.f32.mrf.mxu0
        %v2568 = vadd.f32 0.0, %v2567
        %v2569 = vpop.f32.mrf.mxu0
        %v2570 = vadd.f32 0.0, %v2569
        %v2571 = vpop.f32.mrf.mxu0
        %v2572 = vadd.f32 0.0, %v2571
        %2573 = vdwg.mxu0
        %v2574 = vadd.f32 %v2397, %v2536
        %v2575 = vadd.f32 %v2398, %v2538
        %v2576 = vadd.f32 %v2399, %v2540
        %v2577 = vadd.f32 %v2400, %v2542
        %v2578 = vadd.f32 %v2401, %v2546
        %v2579 = vadd.f32 %v2402, %v2548
        %v2580 = vadd.f32 %v2403, %v2550
        %v2581 = vadd.f32 %v2404, %v2552
        %v2582 = vadd.f32 %v2405, %v2556
        %v2583 = vadd.f32 %v2406, %v2558
        %v2584 = vadd.f32 %v2407, %v2560
        %v2585 = vadd.f32 %v2408, %v2562
        %v2586 = vadd.f32 %v2409, %v2566
        %v2587 = vadd.f32 %v2410, %v2568
        %v2588 = vadd.f32 %v2411, %v2570
        %v2589 = vadd.f32 %v2412, %v2572
        %2590 = vst [vmem:[%s217] sm:$0xff] %v2574
        %2591 = vst [vmem:[%s217 + $0x8] sm:$0xff] %v2575
        %2592 = vst [vmem:[%s217 + $0x10] sm:$0xff] %v2576
        %2593 = vst [vmem:[%s217 + $0x18] sm:$0xff] %v2577
        %2594 = vst [vmem:[%s217 + $0x20] sm:$0xff] %v2578
        %2595 = vst [vmem:[%s217 + $0x28] sm:$0xff] %v2579
        %2596 = vst [vmem:[%s217 + $0x30] sm:$0xff] %v2580
        %2597 = vst [vmem:[%s217 + $0x38] sm:$0xff] %v2581
        %2598 = vst [vmem:[%s217 + $0x40] sm:$0xff] %v2582
        %2599 = vst [vmem:[%s217 + $0x48] sm:$0xff] %v2583
        %2600 = vst [vmem:[%s217 + $0x50] sm:$0xff] %v2584
        %2601 = vst [vmem:[%s217 + $0x58] sm:$0xff] %v2585
        %2602 = vst [vmem:[%s217 + $0x60] sm:$0xff] %v2586
        %2603 = vst [vmem:[%s217 + $0x68] sm:$0xff] %v2587
        %2604 = vst [vmem:[%s217 + $0x70] sm:$0xff] %v2588
        %2605 = vst [vmem:[%s217 + $0x78] sm:$0xff] %v2589
        %s2606 = sand.u32 %s137, 1
        %s2607 = scalar_lea.sflag [#allocation5], %s2606
        %s2608 = sand.u32 %s137, 1
        %s2609 = smul.addr %s2608, 128
        %s2610 = scalar_lea.vmem [#allocation4], %s2609
        // Predicated region
        $region48: #{tpu_custom_call.1} parent=39 // pred_check
          %p2611 = pneg %p147
        $region49: #{tpu_custom_call.1} parent=39 // pred_check_branch
          %2613 = sbr.rel (%p2611) target = $region51
        $region50: #{tpu_custom_call.1} parent=39 // pred_region
          %s2615 = ssub.s32 2048, 2048
          %2616 = vsyncadd %s2607, %s2615
          %s2617 = smul.addr %s19, 16
          %s2618 = smul.addr %s2617, 128
          %s2619 = scalar_lea.hbm %s5, %s2618
          %s2620 = sshll.u32 %s2610, 4
          %s2621 = int_to_ptr.vmem [resolvable:$true] %s2620
          %2626 = dma.vmem_to_hbm [thread:$0]  %s2621, 2048, %s2619, %s2607, 256, 256, 16
        $region51: #{tpu_custom_call.1} parent=39 // pred_fallthru
          _
      $region40: #{tpu_custom_call.1} parent=5 // pred_fallthru
        _
      %p2627 = scmp.le.s32.totalorder 2, %s14
      // Predicated region
      $region52: #{tpu_custom_call.1} parent=5 // pred_check
        %p2628 = pneg %p2627
      $region53: #{tpu_custom_call.1} parent=5 // pred_check_branch
        %2630 = sbr.rel (%p2628) target = $region55
      $region54: #{tpu_custom_call.1} parent=5 // pred_region
        %s2631 = ssub.s32 %s14, 2
        // Predicated region
        $region56: #{tpu_custom_call.1} parent=54 // pred_check
          %p2632 = pneg %p153
        $region57: #{tpu_custom_call.1} parent=54 // pred_check_branch
          %2634 = sbr.rel (%p2632) target = $region59
        $region58: #{tpu_custom_call.1} parent=54 // pred_region
          %s2635 = sand.u32 %s138, 1
          %s2636 = scalar_lea.sflag [#allocation5], %s2635
          %s2637 = sand.u32 %s138, 1
          %s2638 = smul.addr %s2637, 128
          %s2639 = scalar_lea.vmem [#allocation4], %s2638
          %2640 = dma.done %s2636, 2048
        $region59: #{tpu_custom_call.1} parent=54 // pred_fallthru
          _
      $region55: #{tpu_custom_call.1} parent=5 // pred_fallthru
        _
    $region6: #{tpu_custom_call.1} parent=1 // loop_footer
      %s18 = sadd.s32 1, %s14
    $region7: #{tpu_custom_call.1} parent=1 // loop_footer_branch
      %13 = sbr.rel target = $region3
    $region8: #{tpu_custom_call.1} parent=1 // loop_exit
      _
    %2641 = vsyncpa [#allocation5], 1
    %s2642 = scalar_lea.sflag [#allocation5], 1
    %2643 = vsyncpa %s2642, 1

</llo_original>
